<compile_context>
chip_gen: v7x
topology: tpu7x:2x2x1
jax: 0.10.0
libtpu: 0.0.40
codegen_flags: <defaults>
</compile_context>

<pallas_src>
import functools

import jax
import jax.numpy as jnp
from jax.experimental import pallas as pl
from jax.experimental.pallas import tpu as pltpu

_LANE = 128


def _round_up(x, m):
    return (x + m - 1) // m * m


def decoder_attention_kernel(
    s_len,         # static python int: true sequence length (pre-padding)
    emb_ref,       # (TN, Ep)      embedded input token (dropout = identity, eval)
    enc_ref,       # (TS, TN, 2Hp) encoder-state tile (seq-major)
    h0_ref,        # (TN, Hp)      previous hidden state (layer 0)
    c0_ref,        # (TN, Hp)      previous cell state
    we_h_ref,      # (1, Hp)       energy weight, hidden part
    we_e_ref,      # (1, 2Hp)      energy weight, encoder part
    be_ref,        # (1,) SMEM     energy bias (scalar)
    w_fused_ref,   # (2Hp+Ep+Hp, 4Hp) fused LSTM weight, rows = [ctx | emb | hid]
    b_lstm_ref,    # (1, 4Hp)      b_ih + b_hh, gate-block padded
    wfc_ref,       # (Hp, Op)      output projection (transposed, padded)
    bfc_ref,       # (1, Op)
    pred_ref,      # out (TN, Op)  predictions
    h1_ref,        # out (TN, Hp)  new hidden
    c1_ref,        # out (TN, Hp)  new cell
    m_sc,          # scratch (1, TN)    running max
    l_sc,          # scratch (1, TN)    running softmax denominator
    ctx_sc,        # scratch (TN, 2Hp)  running (unnormalized) context
):
    sb = pl.program_id(1)
    ts, tn, _ = enc_ref.shape
    hp = h0_ref.shape[1]

    @pl.when(sb == 0)
    def _init():
        # Energies are ReLU'd (>= 0) and l/ctx start at 0, so m = 0 is safe.
        m_sc[...] = jnp.zeros_like(m_sc)
        l_sc[...] = jnp.zeros_like(l_sc)
        ctx_sc[...] = jnp.zeros_like(ctx_sc)

    enc = enc_ref[...]                                               # (TS, TN, 2Hp)
    h0 = h0_ref[...]                                                 # (TN, Hp)

    # energy = relu(W_e @ [h; enc] + b_e), with the concat split across W_e.
    e_h = jnp.sum(h0 * we_h_ref[...], axis=1)                        # (TN,)
    e_enc = jnp.sum(enc * we_e_ref[...][None, :, :], axis=2)         # (TS, TN)
    energy = jnp.maximum(e_enc + e_h[None, :] + be_ref[0], 0.0)      # (TS, TN)

    # mask the sequence-padding tail (S was padded up to a multiple of TS)
    seq_idx = sb * ts + jax.lax.broadcasted_iota(jnp.int32, (ts, tn), 0)
    energy = jnp.where(seq_idx < s_len, energy, -1e30)

    # online softmax + fused context accumulation over the seq grid axis
    m_prev = m_sc[...]                                               # (1, TN)
    m_new = jnp.maximum(m_prev, jnp.max(energy, axis=0, keepdims=True))
    alpha = jnp.exp(m_prev - m_new)                                  # (1, TN)
    p = jnp.exp(energy - m_new)                                      # (TS, TN)
    l_sc[...] = alpha * l_sc[...] + jnp.sum(p, axis=0, keepdims=True)
    ctx_sc[...] = (alpha.reshape(tn, 1) * ctx_sc[...]
                   + jnp.sum(p[:, :, None] * enc, axis=0))           # (TN, 2Hp)
    m_sc[...] = m_new

    @pl.when(sb == pl.num_programs(1) - 1)
    def _finalize():
        # softmax normalization: EUP approximate reciprocal + one Newton step
        l = l_sc[...]
        inv_l = pl.reciprocal(l, approx=True)
        inv_l = inv_l * (2.0 - l * inv_l)
        context = ctx_sc[...] * inv_l.reshape(tn, 1)                 # (TN, 2Hp)

        # single fused MXU pass for all four LSTM gates
        rnn_in = jnp.concatenate([context, emb_ref[...], h0], axis=1)
        gates = (jnp.dot(rnn_in, w_fused_ref[...],
                         preferred_element_type=jnp.float32)
                 + b_lstm_ref[...])                                  # (TN, 4Hp)

        i_g = jax.nn.sigmoid(gates[:, 0 * hp:1 * hp])
        f_g = jax.nn.sigmoid(gates[:, 1 * hp:2 * hp])
        g_g = jnp.tanh(gates[:, 2 * hp:3 * hp])
        o_g = jax.nn.sigmoid(gates[:, 3 * hp:4 * hp])

        c1 = f_g * c0_ref[...] + i_g * g_g
        h1 = o_g * jnp.tanh(c1)
        c1_ref[...] = c1
        h1_ref[...] = h1

        pred_ref[...] = (jnp.dot(h1, wfc_ref[...],
                                 preferred_element_type=jnp.float32)
                         + bfc_ref[...])


def prepare_params(params, hidden_size, emb_size, output_size):
    """One-time weight preprocessing (hoist this OUT of the decode loop)."""
    H, E, O = hidden_size, emb_size, output_size
    Hp = _round_up(H, _LANE)
    Ep = _round_up(E, _LANE)
    Op = _round_up(O, _LANE)

    def pad_gate_cols(w):
        # (rows, 4H) -> (rows, 4Hp): each gate block padded to Hp lanes so the
        # in-kernel i/f/g/o slices are 128-lane aligned.
        return jnp.concatenate(
            [jnp.pad(w[:, k * H:(k + 1) * H], ((0, 0), (0, Hp - H)))
             for k in range(4)], axis=1)

    w_ih = params["w_ih"]                                     # (4H, 2H + E)
    w_ctx = jnp.pad(pad_gate_cols(w_ih[:, :2 * H].T),
                    ((0, 2 * Hp - 2 * H), (0, 0)))            # (2Hp, 4Hp)
    w_emb = jnp.pad(pad_gate_cols(w_ih[:, 2 * H:].T),
                    ((0, Ep - E), (0, 0)))                    # (Ep, 4Hp)
    w_hid = jnp.pad(pad_gate_cols(params["w_hh"].T),
                    ((0, Hp - H), (0, 0)))                    # (Hp, 4Hp)
    w_fused = jnp.concatenate([w_ctx, w_emb, w_hid], axis=0)  # (2Hp+Ep+Hp, 4Hp)
    b_lstm = pad_gate_cols((params["b_ih"] + params["b_hh"]).reshape(1, 4 * H))

    we = params["w_energy"][0]                                # (3H,)
    we_h = jnp.pad(we[:H].reshape(1, H), ((0, 0), (0, Hp - H)))
    we_e = jnp.pad(we[H:].reshape(1, 2 * H), ((0, 0), (0, 2 * Hp - 2 * H)))
    be = params["b_energy"].reshape(1).astype(jnp.float32)    # SMEM scalar

    wfc = jnp.pad(params["w_fc"].T, ((0, Hp - H), (0, Op - O)))
    bfc = jnp.pad(params["b_fc"].reshape(1, O), ((0, 0), (0, Op - O)))
    emb_tbl = jnp.pad(params["embedding"], ((0, 0), (0, Ep - E)))

    return dict(H=H, E=E, O=O, Hp=Hp, Ep=Ep, Op=Op, emb_tbl=emb_tbl,
                we_h=we_h, we_e=we_e, be=be, w_fused=w_fused, b_lstm=b_lstm,
                wfc=wfc, bfc=bfc)


def prepare_encoder_states(encoder_states, prep, seq_block=256):
    """One-time per decoded sequence: lane-pad 2H and pad S to a tile multiple."""
    S, _, H2 = encoder_states.shape
    Hp = prep["Hp"]
    ts = min(seq_block, S)
    s_pad = _round_up(S, ts)
    enc_p = jnp.pad(encoder_states,
                    ((0, s_pad - S), (0, 0), (0, 2 * Hp - H2)))
    return enc_p, ts, S


def decoder_attention_step(x_tokens, enc_p, seq_len, hidden, cell, prep,
                           seq_block, batch_block=None):
    """One decode step. hidden/cell: (1, N, H); enc_p from prepare_encoder_states."""
    H, O, Hp, Ep, Op = prep["H"], prep["O"], prep["Hp"], prep["Ep"], prep["Op"]
    s_pad, N, _ = enc_p.shape
    TS = seq_block
    assert s_pad % TS == 0
    TN = batch_block if batch_block is not None else N
    assert TN == N or (TN % 8 == 0 and N % TN == 0), "batch tile must be 8-aligned"
    Kp = 2 * Hp + Ep + Hp

    # per-step glue: embedding gather + zero-padding of the recurrent state.
    emb = prep["emb_tbl"][x_tokens]                              # (N, Ep)
    h0_p = jnp.pad(hidden[0], ((0, 0), (0, Hp - H)))
    c0_p = jnp.pad(cell[0], ((0, 0), (0, Hp - H)))

    grid = (N // TN, s_pad // TS)
    const = lambda b, s: (0, 0)
    batch = lambda b, s: (b, 0)

    in_specs = [
        pl.BlockSpec((TN, Ep), batch),                            # emb
        pl.BlockSpec((TS, TN, 2 * Hp), lambda b, s: (s, b, 0)),   # enc (streamed)
        pl.BlockSpec((TN, Hp), batch),                            # h0
        pl.BlockSpec((TN, Hp), batch),                            # c0
        pl.BlockSpec((1, Hp), const),                             # we_h
        pl.BlockSpec((1, 2 * Hp), const),                         # we_e
        pl.BlockSpec(memory_space=pltpu.MemorySpace.SMEM),        # be (scalar)
        pl.BlockSpec((Kp, 4 * Hp), const),                        # w_fused
        pl.BlockSpec((1, 4 * Hp), const),                         # b_lstm
        pl.BlockSpec((Hp, Op), const),                            # wfc
        pl.BlockSpec((1, Op), const),                             # bfc
    ]
    out_specs = (
        pl.BlockSpec((TN, Op), batch),
        pl.BlockSpec((TN, Hp), batch),
        pl.BlockSpec((TN, Hp), batch),
    )
    out_shape = (
        jax.ShapeDtypeStruct((N, Op), jnp.float32),
        jax.ShapeDtypeStruct((N, Hp), jnp.float32),
        jax.ShapeDtypeStruct((N, Hp), jnp.float32),
    )
    scratch_shapes = [
        pltpu.VMEM((1, TN), jnp.float32),        # running max
        pltpu.VMEM((1, TN), jnp.float32),        # running denominator
        pltpu.VMEM((TN, 2 * Hp), jnp.float32),   # running context
    ]

    flops = (4 * s_pad * N * 2 * Hp              # energy + context accumulate
             + 2 * N * Kp * 4 * Hp               # fused LSTM gate matmul
             + 2 * N * Hp * Op)                  # output projection
    bytes_accessed = 4 * (enc_p.size + prep["w_fused"].size + prep["wfc"].size
                          + 5 * N * Hp + N * Ep + N * Op)
    cost = pl.CostEstimate(flops=flops,
                           transcendentals=s_pad * N + 4 * N * Hp,
                           bytes_accessed=bytes_accessed)

    preds_p, h1_p, c1_p = pl.pallas_call(
        functools.partial(decoder_attention_kernel, seq_len),
        out_shape=out_shape,
        grid=grid,
        in_specs=in_specs,
        out_specs=out_specs,
        scratch_shapes=scratch_shapes,
        input_output_aliases={2: 1, 3: 2},       # h0 -> h1, c0 -> c1 in place
        compiler_params=pltpu.CompilerParams(
            dimension_semantics=("parallel", "arbitrary"),
            vmem_limit_bytes=32 * 1024 * 1024),
        cost_estimate=cost,
    )(emb, enc_p, h0_p, c0_p, prep["we_h"], prep["we_e"], prep["be"],
      prep["w_fused"], prep["b_lstm"], prep["wfc"], prep["bfc"])

    return preds_p[:, :O], h1_p[None, :, :H], c1_p[None, :, :H]


def reference_forward(x_tokens, enc, hidden, cell, params):
    """Pure-JAX mirror of the PyTorch forward (eval mode) for verification."""
    emb = params["embedding"][x_tokens][None]                       # (1, N, E)
    S = enc.shape[0]
    H = hidden.shape[-1]
    h_reshape = jnp.tile(hidden, (S, 1, 1))                         # (S, N, H)
    cat = jnp.concatenate([h_reshape, enc], axis=2)                 # (S, N, 3H)
    energy = jax.nn.relu(cat @ params["w_energy"].T + params["b_energy"])  # (S,N,1)
    attention = jax.nn.softmax(energy, axis=0)
    attn = jnp.transpose(attention, (1, 2, 0))                      # (N, 1, S)
    enc_b = jnp.transpose(enc, (1, 0, 2))                           # (N, S, 2H)
    context = jnp.transpose(jnp.matmul(attn, enc_b), (1, 0, 2))     # (1, N, 2H)
    rnn_in = jnp.concatenate([context, emb], axis=2)[0]             # (N, 2H+E)
    gates = (rnn_in @ params["w_ih"].T + params["b_ih"]
             + hidden[0] @ params["w_hh"].T + params["b_hh"])
    i = jax.nn.sigmoid(gates[:, :H])
    f = jax.nn.sigmoid(gates[:, H:2 * H])
    g = jnp.tanh(gates[:, 2 * H:3 * H])
    o = jax.nn.sigmoid(gates[:, 3 * H:])
    c1 = f * cell[0] + i * g
    h1 = o * jnp.tanh(c1)
    preds = h1 @ params["w_fc"].T + params["b_fc"]
    return preds, h1[None], c1[None]


def make_params(key, vocab, emb_size, hidden, output):
    ks = jax.random.split(key, 10)
    u = lambda k, shape, scale: jax.random.uniform(k, shape, jnp.float32, -scale, scale)
    H = hidden
    rnn_in = 2 * H + emb_size
    return {
        "embedding": jax.random.normal(ks[0], (vocab, emb_size), jnp.float32),
        "w_energy": u(ks[1], (1, 3 * H), (3 * H) ** -0.5),
        "b_energy": u(ks[2], (1,), (3 * H) ** -0.5),
        "w_ih": u(ks[3], (4 * H, rnn_in), H ** -0.5),
        "w_hh": u(ks[4], (4 * H, H), H ** -0.5),
        "b_ih": u(ks[5], (4 * H,), H ** -0.5),
        "b_hh": u(ks[6], (4 * H,), H ** -0.5),
        "w_fc": u(ks[7], (output, H), H ** -0.5),
        "b_fc": u(ks[8], (output,), H ** -0.5),
    }


if __name__ == "__main__":
    # small, module-consistent shapes
    VOCAB, EMB, HIDDEN, OUTPUT = 30, 16, 32, 24
    SEQ, BATCH = 10, 2
    NUM_LAYERS = 1   # module's cat(hidden.repeat(S,1,1), enc) requires num_layers == 1
    SEQ_BLOCK = 4    # 3 sequence tiles -> exercises online softmax + tail masking
    # TODO(synk): dropout p is treated as eval-mode (identity); stochastic training-mode
    # dropout is intentionally not reproduced inside the kernel.

    key = jax.random.PRNGKey(0)
    kp, kx, ke, kh, kc = jax.random.split(key, 5)

    params = make_params(kp, VOCAB, EMB, HIDDEN, OUTPUT)
    x_tokens = jax.random.randint(kx, (BATCH,), 0, VOCAB)
    encoder_states = jax.random.normal(ke, (SEQ, BATCH, 2 * HIDDEN), jnp.float32)
    hidden0 = jax.random.normal(kh, (NUM_LAYERS, BATCH, HIDDEN), jnp.float32)
    cell0 = jax.random.normal(kc, (NUM_LAYERS, BATCH, HIDDEN), jnp.float32)

    # pure-JAX reference (kernel aliases only its own padded state copies,
    # so the caller-visible arrays stay intact; reference computed up front anyway)
    preds_r, h1_r, c1_r = reference_forward(
        x_tokens, encoder_states, hidden0, cell0, params)

    # one-time preprocessing, hoisted out of the per-token decode loop
    prep = prepare_params(params, HIDDEN, EMB, OUTPUT)
    enc_p, seq_block, seq_len = prepare_encoder_states(
        encoder_states, prep, seq_block=SEQ_BLOCK)

    preds, h1, c1 = decoder_attention_step(
        x_tokens, enc_p, seq_len, hidden0, cell0, prep, seq_block=seq_block)
    jax.block_until_ready((preds, h1, c1))

    assert preds.shape == (BATCH, OUTPUT)
    assert h1.shape == (NUM_LAYERS, BATCH, HIDDEN)
    assert c1.shape == (NUM_LAYERS, BATCH, HIDDEN)
    # tolerance 1e-4: the softmax denominator uses the EUP approximate
    # reciprocal + one Newton step instead of an exact divide
    assert jnp.allclose(preds, preds_r, atol=1e-4, rtol=1e-4)
    assert jnp.allclose(h1, h1_r, atol=1e-4, rtol=1e-4)
    assert jnp.allclose(c1, c1_r, atol=1e-4, rtol=1e-4)

    print("KERNEL_OK")
</pallas_src>

<mosaic_0001>
module attributes {stable_mosaic.version = 11 : i64} {
  func.func @decoder_attention_kernel(%arg0: i32, %arg1: i32, %arg2: memref<2x128xf32, #tpu.memory_space<vmem>>, %arg3: memref<4x2x256xf32, #tpu.memory_space<vmem>>, %arg4: memref<2x128xf32, #tpu.memory_space<vmem>>, %arg5: memref<2x128xf32, #tpu.memory_space<vmem>>, %arg6: memref<1x128xf32, #tpu.memory_space<vmem>>, %arg7: memref<1x256xf32, #tpu.memory_space<vmem>>, %arg8: memref<1xf32, #tpu.memory_space<smem>>, %arg9: memref<512x512xf32, #tpu.memory_space<vmem>>, %arg10: memref<1x512xf32, #tpu.memory_space<vmem>>, %arg11: memref<128x128xf32, #tpu.memory_space<vmem>>, %arg12: memref<1x128xf32, #tpu.memory_space<vmem>>, %arg13: memref<2x128xf32, #tpu.memory_space<vmem>>, %arg14: memref<2x128xf32, #tpu.memory_space<vmem>>, %arg15: memref<2x128xf32, #tpu.memory_space<vmem>>, %arg16: memref<1x2xf32, #tpu.memory_space<vmem>>, %arg17: memref<1x2xf32, #tpu.memory_space<vmem>>, %arg18: memref<2x256xf32, #tpu.memory_space<vmem>>) attributes {dimension_semantics = [#tpu.dimension_semantics<parallel>, #tpu.dimension_semantics<arbitrary>], iteration_bounds = array<i64: 1, 3>, scalar_prefetch = 0 : i64, scratch_operands = 3 : i64, tpu.core_type = #tpu.core_type<tc>, window_params = [{transform_indices = @transform_0, window_bounds = array<i64: 2, 128>}, {transform_indices = @transform_1, window_bounds = array<i64: 4, 2, 256>}, {transform_indices = @transform_2, window_bounds = array<i64: 2, 128>}, {transform_indices = @transform_3, window_bounds = array<i64: 2, 128>}, {pipeline_mode = #tpu.pipeline_mode<synchronous>, transform_indices = @transform_4, window_bounds = array<i64: 1, 128>}, {pipeline_mode = #tpu.pipeline_mode<synchronous>, transform_indices = @transform_5, window_bounds = array<i64: 1, 256>}, {transform_indices = @transform_6, window_bounds = array<i64: 1>}, {pipeline_mode = #tpu.pipeline_mode<synchronous>, transform_indices = @transform_7, window_bounds = array<i64: 512, 512>}, {pipeline_mode = #tpu.pipeline_mode<synchronous>, transform_indices = @transform_8, window_bounds = array<i64: 1, 512>}, {pipeline_mode = #tpu.pipeline_mode<synchronous>, transform_indices = @transform_9, window_bounds = array<i64: 128, 128>}, {pipeline_mode = #tpu.pipeline_mode<synchronous>, transform_indices = @transform_10, window_bounds = array<i64: 1, 128>}, {transform_indices = @transform_11, window_bounds = array<i64: 2, 128>}, {transform_indices = @transform_12, window_bounds = array<i64: 2, 128>}, {transform_indices = @transform_13, window_bounds = array<i64: 2, 128>}]} {
    %c0_i32 = arith.constant 0 : i32
    %0 = arith.cmpi eq, %arg1, %c0_i32 : i32
    %1 = arith.extui %0 : i1 to i32
    %c0_i32_0 = arith.constant 0 : i32
    %2 = arith.cmpi ne, %1, %c0_i32_0 : i32
    scf.if %2 {
      %cst_29 = arith.constant 0.000000e+00 : f32
      %59 = vector.broadcast %cst_29 : f32 to vector<1x2xf32>
      %c0_30 = arith.constant 0 : index
      %c0_31 = arith.constant 0 : index
      %60 = vector.load %arg16[%c0_30, %c0_31] : memref<1x2xf32, #tpu.memory_space<vmem>>, vector<1x2xf32>
      tpu.vector_store %arg16[%c0_30, %c0_31], %59 {strides = array<i32>} : memref<1x2xf32, #tpu.memory_space<vmem>>, vector<1x2xf32>,
      %cst_32 = arith.constant 0.000000e+00 : f32
      %61 = vector.broadcast %cst_32 : f32 to vector<1x2xf32>
      %c0_33 = arith.constant 0 : index
      %c0_34 = arith.constant 0 : index
      %62 = vector.load %arg17[%c0_33, %c0_34] : memref<1x2xf32, #tpu.memory_space<vmem>>, vector<1x2xf32>
      tpu.vector_store %arg17[%c0_33, %c0_34], %61 {strides = array<i32>} : memref<1x2xf32, #tpu.memory_space<vmem>>, vector<1x2xf32>,
      %cst_35 = arith.constant 0.000000e+00 : f32
      %63 = vector.broadcast %cst_35 : f32 to vector<2x256xf32>
      %c0_36 = arith.constant 0 : index
      %c0_37 = arith.constant 0 : index
      %64 = vector.load %arg18[%c0_36, %c0_37] : memref<2x256xf32, #tpu.memory_space<vmem>>, vector<2x256xf32>
      tpu.vector_store %arg18[%c0_36, %c0_37], %63 {strides = array<i32>} : memref<2x256xf32, #tpu.memory_space<vmem>>, vector<2x256xf32>,
    } else {
    }
    %c0 = arith.constant 0 : index
    %c0_1 = arith.constant 0 : index
    %c0_2 = arith.constant 0 : index
    %3 = vector.load %arg3[%c0, %c0_1, %c0_2] : memref<4x2x256xf32, #tpu.memory_space<vmem>>, vector<4x2x256xf32>
    %c0_3 = arith.constant 0 : index
    %c0_4 = arith.constant 0 : index
    %4 = vector.load %arg4[%c0_3, %c0_4] : memref<2x128xf32, #tpu.memory_space<vmem>>, vector<2x128xf32>
    %c0_5 = arith.constant 0 : index
    %c0_6 = arith.constant 0 : index
    %5 = vector.load %arg6[%c0_5, %c0_6] : memref<1x128xf32, #tpu.memory_space<vmem>>, vector<1x128xf32>
    %6 = vector.broadcast %5 : vector<1x128xf32> to vector<2x128xf32>
    %7 = arith.mulf %4, %6 : vector<2x128xf32>
    %cst = arith.constant dense<0.000000e+00> : vector<2xf32>
    %8 = vector.multi_reduction <add>, %7, %cst [1] : vector<2x128xf32> to vector<2xf32>
    %c0_7 = arith.constant 0 : index
    %c0_8 = arith.constant 0 : index
    %9 = vector.load %arg7[%c0_7, %c0_8] : memref<1x256xf32, #tpu.memory_space<vmem>>, vector<1x256xf32>
    %10 = vector.shape_cast %9 : vector<1x256xf32> to vector<1x1x256xf32>
    %11 = vector.broadcast %10 : vector<1x1x256xf32> to vector<4x2x256xf32>
    %12 = arith.mulf %3, %11 : vector<4x2x256xf32>
    %cst_9 = arith.constant dense<0.000000e+00> : vector<4x2xf32>
    %13 = vector.multi_reduction <add>, %12, %cst_9 [2] : vector<4x2x256xf32> to vector<4x2xf32>
    %14 = vector.shape_cast %8 : vector<2xf32> to vector<1x2xf32>
    %15 = vector.broadcast %14 : vector<1x2xf32> to vector<4x2xf32>
    %16 = arith.addf %13, %15 : vector<4x2xf32>
    %c0_10 = arith.constant 0 : index
    %17 = memref.load %arg8[%c0_10] : memref<1xf32, #tpu.memory_space<smem>>
    %18 = vector.broadcast %17 : f32 to vector<4x2xf32>
    %19 = arith.addf %16, %18 : vector<4x2xf32>
    %cst_11 = arith.constant 0.000000e+00 : f32
    %20 = vector.broadcast %cst_11 : f32 to vector<4x2xf32>
    %21 = arith.maximumf %19, %20 : vector<4x2xf32>
    %c4_i32 = arith.constant 4 : i32
    %22 = arith.muli %arg1, %c4_i32 : i32
    %23 = tpu.iota {dimensions = array<i32: 0>} : vector<4x2xi32>
    %24 = vector.broadcast %22 : i32 to vector<4x2xi32>
    %25 = arith.addi %24, %23 : vector<4x2xi32>
    %c10_i32 = arith.constant 10 : i32
    %26 = vector.broadcast %c10_i32 : i32 to vector<4x2xi32>
    %27 = arith.cmpi slt, %25, %26 : vector<4x2xi32>
    %cst_12 = arith.constant -1.000000e+30 : f32
    %28 = vector.broadcast %cst_12 : f32 to vector<4x2xf32>
    %29 = arith.select %27, %21, %28 : vector<4x2xi1>, vector<4x2xf32>
    %c0_13 = arith.constant 0 : index
    %c0_14 = arith.constant 0 : index
    %30 = vector.load %arg16[%c0_13, %c0_14] : memref<1x2xf32, #tpu.memory_space<vmem>>, vector<1x2xf32>
    %cst_15 = arith.constant dense<0xFF800000> : vector<2xf32>
    %31 = vector.multi_reduction <maximumf>, %29, %cst_15 [0] : vector<4x2xf32> to vector<2xf32>
    %32 = vector.shape_cast %31 : vector<2xf32> to vector<1x2xf32>
    %33 = arith.maximumf %30, %32 : vector<1x2xf32>
    %34 = arith.subf %30, %33 : vector<1x2xf32>
    %35 = math.exp %34 : vector<1x2xf32>
    %36 = vector.broadcast %33 : vector<1x2xf32> to vector<4x2xf32>
    %37 = arith.subf %29, %36 : vector<4x2xf32>
    %38 = math.exp %37 : vector<4x2xf32>
    %c0_16 = arith.constant 0 : index
    %c0_17 = arith.constant 0 : index
    %39 = vector.load %arg17[%c0_16, %c0_17] : memref<1x2xf32, #tpu.memory_space<vmem>>, vector<1x2xf32>
    %40 = arith.mulf %35, %39 : vector<1x2xf32>
    %cst_18 = arith.constant dense<0.000000e+00> : vector<2xf32>
    %41 = vector.multi_reduction <add>, %38, %cst_18 [0] : vector<4x2xf32> to vector<2xf32>
    %42 = vector.shape_cast %41 : vector<2xf32> to vector<1x2xf32>
    %43 = arith.addf %40, %42 : vector<1x2xf32>
    %c0_19 = arith.constant 0 : index
    %c0_20 = arith.constant 0 : index
    %44 = vector.load %arg17[%c0_19, %c0_20] : memref<1x2xf32, #tpu.memory_space<vmem>>, vector<1x2xf32>
    tpu.vector_store %arg17[%c0_19, %c0_20], %43 {strides = array<i32>} : memref<1x2xf32, #tpu.memory_space<vmem>>, vector<1x2xf32>,
    %45 = vector.shape_cast %35 : vector<1x2xf32> to vector<2x1xf32>
    %c0_21 = arith.constant 0 : index
    %c0_22 = arith.constant 0 : index
    %46 = vector.load %arg18[%c0_21, %c0_22] : memref<2x256xf32, #tpu.memory_space<vmem>>, vector<2x256xf32>
    %47 = vector.broadcast %45 : vector<2x1xf32> to vector<2x256xf32>
    %48 = arith.mulf %47, %46 : vector<2x256xf32>
    %49 = vector.shape_cast %38 : vector<4x2xf32> to vector<4x2x1xf32>
    %50 = vector.broadcast %49 : vector<4x2x1xf32> to vector<4x2x256xf32>
    %51 = arith.mulf %50, %3 : vector<4x2x256xf32>
    %cst_23 = arith.constant dense<0.000000e+00> : vector<2x256xf32>
    %52 = vector.multi_reduction <add>, %51, %cst_23 [0] : vector<4x2x256xf32> to vector<2x256xf32>
    %53 = arith.addf %48, %52 : vector<2x256xf32>
    %c0_24 = arith.constant 0 : index
    %c0_25 = arith.constant 0 : index
    %54 = vector.load %arg18[%c0_24, %c0_25] : memref<2x256xf32, #tpu.memory_space<vmem>>, vector<2x256xf32>
    tpu.vector_store %arg18[%c0_24, %c0_25], %53 {strides = array<i32>} : memref<2x256xf32, #tpu.memory_space<vmem>>, vector<2x256xf32>,
    %c0_26 = arith.constant 0 : index
    %c0_27 = arith.constant 0 : index
    %55 = vector.load %arg16[%c0_26, %c0_27] : memref<1x2xf32, #tpu.memory_space<vmem>>, vector<1x2xf32>
    tpu.vector_store %arg16[%c0_26, %c0_27], %33 {strides = array<i32>} : memref<1x2xf32, #tpu.memory_space<vmem>>, vector<1x2xf32>,
    %c2_i32 = arith.constant 2 : i32
    %56 = arith.cmpi eq, %arg1, %c2_i32 : i32
    %57 = arith.extui %56 : i1 to i32
    %c0_i32_28 = arith.constant 0 : i32
    %58 = arith.cmpi ne, %57, %c0_i32_28 : i32
    scf.if %58 {
      %c0_29 = arith.constant 0 : index
      %c0_30 = arith.constant 0 : index
      %59 = vector.load %arg17[%c0_29, %c0_30] : memref<1x2xf32, #tpu.memory_space<vmem>>, vector<1x2xf32>
      %60 = tpu.reciprocal %59 {approx = true} : vector<1x2xf32> -> vector<1x2xf32>
      %61 = arith.mulf %59, %60 : vector<1x2xf32>
      %cst_31 = arith.constant 2.000000e+00 : f32
      %62 = vector.broadcast %cst_31 : f32 to vector<1x2xf32>
      %63 = arith.subf %62, %61 : vector<1x2xf32>
      %64 = arith.mulf %60, %63 : vector<1x2xf32>
      %c0_32 = arith.constant 0 : index
      %c0_33 = arith.constant 0 : index
      %65 = vector.load %arg18[%c0_32, %c0_33] : memref<2x256xf32, #tpu.memory_space<vmem>>, vector<2x256xf32>
      %66 = vector.shape_cast %64 : vector<1x2xf32> to vector<2x1xf32>
      %67 = vector.broadcast %66 : vector<2x1xf32> to vector<2x256xf32>
      %68 = arith.mulf %65, %67 : vector<2x256xf32>
      %c0_34 = arith.constant 0 : index
      %c0_35 = arith.constant 0 : index
      %69 = vector.load %arg2[%c0_34, %c0_35] : memref<2x128xf32, #tpu.memory_space<vmem>>, vector<2x128xf32>
      %70 = tpu.concatenate %68, %69, %4 in 1 : vector<2x256xf32>, vector<2x128xf32>, vector<2x128xf32> -> vector<2x512xf32>
      %c0_36 = arith.constant 0 : index
      %c0_37 = arith.constant 0 : index
      %71 = vector.load %arg9[%c0_36, %c0_37] : memref<512x512xf32, #tpu.memory_space<vmem>>, vector<512x512xf32>
      %cst_38 = arith.constant dense<0.000000e+00> : vector<2x512xf32>
      %72 = tpu.matmul %70, %71, %cst_38 {dimension_numbers = #tpu.dot_dimension_numbers<[1], [0], [0], [1], [0, 0, 1, 1], [], []>} : vector<2x512xf32>, vector<512x512xf32>, vector<2x512xf32> -> vector<2x512xf32>
      %c0_39 = arith.constant 0 : index
      %c0_40 = arith.constant 0 : index
      %73 = vector.load %arg10[%c0_39, %c0_40] : memref<1x512xf32, #tpu.memory_space<vmem>>, vector<1x512xf32>
      %74 = vector.broadcast %73 : vector<1x512xf32> to vector<2x512xf32>
      %75 = arith.addf %72, %74 : vector<2x512xf32>
      %76 = vector.extract_strided_slice %75 {offsets = [0, 0], sizes = [2, 128], strides = [1, 1]} : vector<2x512xf32> to vector<2x128xf32>
      %77 = arith.negf %76 : vector<2x128xf32>
      %78 = math.exp %77 : vector<2x128xf32>
      %cst_41 = arith.constant 1.000000e+00 : f32
      %79 = vector.broadcast %cst_41 : f32 to vector<2x128xf32>
      %80 = arith.addf %79, %78 : vector<2x128xf32>
      %81 = arith.divf %79, %80 : vector<2x128xf32>
      %82 = vector.extract_strided_slice %75 {offsets = [0, 128], sizes = [2, 128], strides = [1, 1]} : vector<2x512xf32> to vector<2x128xf32>
      %83 = arith.negf %82 : vector<2x128xf32>
      %84 = math.exp %83 : vector<2x128xf32>
      %cst_42 = arith.constant 1.000000e+00 : f32
      %85 = vector.broadcast %cst_42 : f32 to vector<2x128xf32>
      %86 = arith.addf %85, %84 : vector<2x128xf32>
      %87 = arith.divf %85, %86 : vector<2x128xf32>
      %88 = vector.extract_strided_slice %75 {offsets = [0, 256], sizes = [2, 128], strides = [1, 1]} : vector<2x512xf32> to vector<2x128xf32>
      %89 = math.tanh %88 : vector<2x128xf32>
      %90 = vector.extract_strided_slice %75 {offsets = [0, 384], sizes = [2, 128], strides = [1, 1]} : vector<2x512xf32> to vector<2x128xf32>
      %91 = arith.negf %90 : vector<2x128xf32>
      %92 = math.exp %91 : vector<2x128xf32>
      %cst_43 = arith.constant 1.000000e+00 : f32
      %93 = vector.broadcast %cst_43 : f32 to vector<2x128xf32>
      %94 = arith.addf %93, %92 : vector<2x128xf32>
      %95 = arith.divf %93, %94 : vector<2x128xf32>
      %c0_44 = arith.constant 0 : index
      %c0_45 = arith.constant 0 : index
      %96 = vector.load %arg5[%c0_44, %c0_45] : memref<2x128xf32, #tpu.memory_space<vmem>>, vector<2x128xf32>
      %97 = arith.mulf %87, %96 : vector<2x128xf32>
      %98 = arith.mulf %81, %89 : vector<2x128xf32>
      %99 = arith.addf %97, %98 : vector<2x128xf32>
      %100 = math.tanh %99 : vector<2x128xf32>
      %101 = arith.mulf %95, %100 : vector<2x128xf32>
      %c0_46 = arith.constant 0 : index
      %c0_47 = arith.constant 0 : index
      %102 = vector.load %arg15[%c0_46, %c0_47] : memref<2x128xf32, #tpu.memory_space<vmem>>, vector<2x128xf32>
      tpu.vector_store %arg15[%c0_46, %c0_47], %99 {strides = array<i32>} : memref<2x128xf32, #tpu.memory_space<vmem>>, vector<2x128xf32>,
      %c0_48 = arith.constant 0 : index
      %c0_49 = arith.constant 0 : index
      %103 = vector.load %arg14[%c0_48, %c0_49] : memref<2x128xf32, #tpu.memory_space<vmem>>, vector<2x128xf32>
      tpu.vector_store %arg14[%c0_48, %c0_49], %101 {strides = array<i32>} : memref<2x128xf32, #tpu.memory_space<vmem>>, vector<2x128xf32>,
      %c0_50 = arith.constant 0 : index
      %c0_51 = arith.constant 0 : index
      %104 = vector.load %arg11[%c0_50, %c0_51] : memref<128x128xf32, #tpu.memory_space<vmem>>, vector<128x128xf32>
      %cst_52 = arith.constant dense<0.000000e+00> : vector<2x128xf32>
      %105 = tpu.matmul %101, %104, %cst_52 {dimension_numbers = #tpu.dot_dimension_numbers<[1], [0], [0], [1], [0, 0, 1, 1], [], []>} : vector<2x128xf32>, vector<128x128xf32>, vector<2x128xf32> -> vector<2x128xf32>
      %c0_53 = arith.constant 0 : index
      %c0_54 = arith.constant 0 : index
      %106 = vector.load %arg12[%c0_53, %c0_54] : memref<1x128xf32, #tpu.memory_space<vmem>>, vector<1x128xf32>
      %107 = vector.broadcast %106 : vector<1x128xf32> to vector<2x128xf32>
      %108 = arith.addf %105, %107 : vector<2x128xf32>
      %c0_55 = arith.constant 0 : index
      %c0_56 = arith.constant 0 : index
      %109 = vector.load %arg13[%c0_55, %c0_56] : memref<2x128xf32, #tpu.memory_space<vmem>>, vector<2x128xf32>
      tpu.vector_store %arg13[%c0_55, %c0_56], %108 {strides = array<i32>} : memref<2x128xf32, #tpu.memory_space<vmem>>, vector<2x128xf32>,
    } else {
    }
    return
  }
  func.func @transform_0(%arg0: i32, %arg1: i32) -> (i32, i32) {
    %c0_i32 = arith.constant 0 : i32
    %c0_i32_0 = arith.constant 0 : i32
    return %arg0, %c0_i32 : i32, i32
  }
  func.func @transform_1(%arg0: i32, %arg1: i32) -> (i32, i32, i32) {
    %c0_i32 = arith.constant 0 : i32
    %c0_i32_0 = arith.constant 0 : i32
    return %arg1, %arg0, %c0_i32 : i32, i32, i32
  }
  func.func @transform_2(%arg0: i32, %arg1: i32) -> (i32, i32) {
    %c0_i32 = arith.constant 0 : i32
    %c0_i32_0 = arith.constant 0 : i32
    return %arg0, %c0_i32 : i32, i32
  }
  func.func @transform_3(%arg0: i32, %arg1: i32) -> (i32, i32) {
    %c0_i32 = arith.constant 0 : i32
    %c0_i32_0 = arith.constant 0 : i32
    return %arg0, %c0_i32 : i32, i32
  }
  func.func @transform_4(%arg0: i32, %arg1: i32) -> (i32, i32) {
    %c0_i32 = arith.constant 0 : i32
    %c0_i32_0 = arith.constant 0 : i32
    %c0_i32_1 = arith.constant 0 : i32
    return %c0_i32, %c0_i32_0 : i32, i32
  }
  func.func @transform_5(%arg0: i32, %arg1: i32) -> (i32, i32) {
    %c0_i32 = arith.constant 0 : i32
    %c0_i32_0 = arith.constant 0 : i32
    %c0_i32_1 = arith.constant 0 : i32
    return %c0_i32, %c0_i32_0 : i32, i32
  }
  func.func @transform_6(%arg0: i32, %arg1: i32) -> i32 {
    %c0_i32 = arith.constant 0 : i32
    %c0_i32_0 = arith.constant 0 : i32
    return %c0_i32 : i32
  }
  func.func @transform_7(%arg0: i32, %arg1: i32) -> (i32, i32) {
    %c0_i32 = arith.constant 0 : i32
    %c0_i32_0 = arith.constant 0 : i32
    %c0_i32_1 = arith.constant 0 : i32
    return %c0_i32, %c0_i32_0 : i32, i32
  }
  func.func @transform_8(%arg0: i32, %arg1: i32) -> (i32, i32) {
    %c0_i32 = arith.constant 0 : i32
    %c0_i32_0 = arith.constant 0 : i32
    %c0_i32_1 = arith.constant 0 : i32
    return %c0_i32, %c0_i32_0 : i32, i32
  }
  func.func @transform_9(%arg0: i32, %arg1: i32) -> (i32, i32) {
    %c0_i32 = arith.constant 0 : i32
    %c0_i32_0 = arith.constant 0 : i32
    %c0_i32_1 = arith.constant 0 : i32
    return %c0_i32, %c0_i32_0 : i32, i32
  }
  func.func @transform_10(%arg0: i32, %arg1: i32) -> (i32, i32) {
    %c0_i32 = arith.constant 0 : i32
    %c0_i32_0 = arith.constant 0 : i32
    %c0_i32_1 = arith.constant 0 : i32
    return %c0_i32, %c0_i32_0 : i32, i32
  }
  func.func @transform_11(%arg0: i32, %arg1: i32) -> (i32, i32) {
    %c0_i32 = arith.constant 0 : i32
    %c0_i32_0 = arith.constant 0 : i32
    return %arg0, %c0_i32 : i32, i32
  }
  func.func @transform_12(%arg0: i32, %arg1: i32) -> (i32, i32) {
    %c0_i32 = arith.constant 0 : i32
    %c0_i32_0 = arith.constant 0 : i32
    return %arg0, %c0_i32 : i32, i32
  }
  func.func @transform_13(%arg0: i32, %arg1: i32) -> (i32, i32) {
    %c0_i32 = arith.constant 0 : i32
    %c0_i32_0 = arith.constant 0 : i32
    return %arg0, %c0_i32 : i32, i32
  }
}

</mosaic_0001>

<llo_original>
// kernel: tpu_custom_call.1
$region0: #{tpu_custom_call.1}
  #allocation0 [shape = 'u32[]', space=smem, size = 0x4, offset = 0x4, fixed_abs, tag = 'smem constant byte address 0x4 - core index']
  #allocation1 [shape = 'u32[144,128]{1,0:T(1,128)}', space=vmem, size = 0x12000, scoped, tag = 'internal scratch']
  #allocation2 [shape = 'f32[1,2]{1,0:T(1,128)}', space=vmem, size = 0x200, scoped, tag = 'scratch operand']
  #allocation3 [shape = 'f32[1,2]{1,0:T(1,128)}', space=vmem, size = 0x200, scoped, tag = 'scratch operand']
  #allocation4 [shape = 'f32[2,256]{1,0:T(2,128)}', space=vmem, size = 0x800, scoped, tag = 'scratch operand']
  #allocation5 [shape = 'f32[1]{0:T(128)S(6)}', space=smem, size = 0x200, scoped, tag = 'scoped memory for tpu_custom_call.1']
  %s0 = inlined_call_operand.vmem [shape: f32[2,128], index: 0, kind: input, shape index: {}]
  %s1 = inlined_call_operand.hbm [shape: f32[12,2,256], index: 1, kind: input, shape index: {}]
  %s2 = inlined_call_operand.hbm [shape: f32[2,128], index: 2, kind: input, shape index: {}, may-alias: {2,12}]
  %s3 = inlined_call_operand.hbm [shape: f32[2,128], index: 3, kind: input, shape index: {}, may-alias: {3,13}]
  %s4 = inlined_call_operand.vmem [shape: f32[1,128], index: 4, kind: input, shape index: {}]
  %s5 = inlined_call_operand.vmem [shape: f32[1,256], index: 5, kind: input, shape index: {}]
  %s6 = inlined_call_operand.<no memory space> [shape: f32[1], index: 6, kind: input, shape index: {}]
  %s7 = inlined_call_operand.hbm [shape: f32[512,512], index: 7, kind: input, shape index: {}]
  %s8 = inlined_call_operand.vmem [shape: f32[1,512], index: 8, kind: input, shape index: {}]
  %s9 = inlined_call_operand.hbm [shape: f32[128,128], index: 9, kind: input, shape index: {}]
  %s10 = inlined_call_operand.hbm [shape: f32[1,128], index: 10, kind: input, shape index: {}]
  %s11 = inlined_call_operand.hbm [shape: f32[2,128], index: 11, kind: output, shape index: {0}]
  %s12 = inlined_call_operand.hbm [shape: f32[2,128], index: 12, kind: output, shape index: {1}, may-alias: {2,12}]
  %s13 = inlined_call_operand.hbm [shape: f32[2,128], index: 13, kind: output, shape index: {2}, may-alias: {3,13}]
  %14 = xla_tuple %s11, %s12, %s13
  %s15 = sld [smem:[#allocation0]]
  $region125: #{tpu_custom_call.1} parent=0
    _
  %s17 = ssub.s32 1, %s15
  %s18 = scalar_select 0, %s17, %s15
  %19 = sst [smem:[#allocation5]] %s6
  $region1: #{tpu_custom_call.1} parent=0
    #allocation6 [shape = 'u8[16384]{0}', space=vmem, size = 0x4000, scoped, tag = 'input window, operand 1']
    #allocation7 [shape = 's32[2]{0}', space=sflag, size = 0x8, scoped, tag = 'scoped memory for tpu_custom_call.1']
    #allocation8 [shape = 's32[2]{0}', space=sflag, size = 0x8, scoped, tag = 'scoped memory for tpu_custom_call.1']
    #allocation9 [shape = 'u8[1024]{0}', space=vmem, size = 0x400, scoped, tag = 'input window, operand 2, single buffered']
    #allocation10 [shape = 's32[1]{0}', space=sflag, size = 0x4, scoped, tag = 'scoped memory for tpu_custom_call.1']
    #allocation11 [shape = 'u8[1024]{0}', space=vmem, size = 0x400, scoped, tag = 'input window, operand 3, single buffered']
    #allocation12 [shape = 'u8[1048576]{0}', space=vmem, size = 0x100000, scoped, tag = 'input window, operand 7, single buffered']
    #allocation13 [shape = 's32[1]{0}', space=sflag, size = 0x4, scoped, tag = 'scoped memory for tpu_custom_call.1']
    #allocation14 [shape = 'u8[65536]{0}', space=vmem, size = 0x10000, scoped, tag = 'input window, operand 9, single buffered']
    #allocation15 [shape = 'u8[512]{0}', space=vmem, size = 0x400, scoped, tag = 'input window, operand 10, single buffered']
    #allocation16 [shape = 's32[1]{0}', space=sflag, size = 0x4, scoped, tag = 'scoped memory for tpu_custom_call.1']
    #allocation17 [shape = 'u8[1024]{0}', space=vmem, size = 0x400, scoped, tag = 'output window, operand 0, single buffered']
    #allocation18 [shape = 'u8[1024]{0}', space=vmem, size = 0x400, scoped, tag = 'output window, operand 1, single buffered']
    #allocation19 [shape = 's32[1]{0}', space=sflag, size = 0x4, scoped, tag = 'scoped memory for tpu_custom_call.1']
    #allocation20 [shape = 'u8[1024]{0}', space=vmem, size = 0x400, scoped, tag = 'output window, operand 2, single buffered']
    %20 = vsyncpa [#allocation7], 0
    %s21 = scalar_lea.sflag [#allocation7], 1
    %22 = vsyncpa %s21, 0
    %23 = vsyncpa [#allocation10], 0
    %24 = vsyncpa [#allocation13], 0
    %25 = vsyncpa [#allocation16], 0
    %26 = vsyncpa [#allocation8], 0
    %27 = vsyncpa [#allocation19], 0
    loop: start=0, step=1, limit=5
    $region2: #{tpu_custom_call.1} parent=1 // loop_pre_header
      _
    $region3: #{tpu_custom_call.1} parent=1 // loop_header
      %s29 = sphi 0, %s33
      %p30 = scmp.ge.s32.totalorder %s29, 5
      %s36 = sphi 0, %s48
      %s37 = sphi 0, %s44
      %s38 = sphi 0, %s36
      %s39 = sphi 0, %s37
      %s40 = sphi 0, %s38
      %s41 = sphi 0, %s39
      %s51 = sphi 0, %s53
      %s54 = sphi 0, %s51
      %s55 = sphi 0, %s54
      %s71 = sphi 0, %s55
      %s79 = sphi 0, %s81
      %s82 = sphi 0, %s79
      %s83 = sphi 0, %s82
      %s99 = sphi 0, %s83
      %s105 = sphi 0, %s107
      %s108 = sphi 0, %s105
      %s109 = sphi 0, %s108
      %s125 = sphi 0, %s109
      %s131 = sphi 0, %s133
      %s134 = sphi 0, %s131
      %s135 = sphi 0, %s134
      %s151 = sphi 0, %s135
      %s155 = sphi 0, %s155
      %s157 = sphi 0, %s155
      %s158 = sphi 0, %s157
      %s172 = sphi 0, %s158
      %s176 = sphi 0, %s176
      %s178 = sphi 0, %s176
      %s179 = sphi 0, %s178
      %s193 = sphi 0, %s179
      %s197 = sphi 0, %s197
      %s199 = sphi 0, %s197
      %s200 = sphi 0, %s199
      %s214 = sphi 0, %s200
      %s218 = sphi 0, %s218
      %s220 = sphi 0, %s218
      %s221 = sphi 0, %s220
      %s235 = sphi 0, %s221
      %s239 = sphi 0, %s239
      %s241 = sphi 0, %s239
      %s242 = sphi 0, %s241
      %s256 = sphi 0, %s242
      %s260 = sphi 0, %s260
      %s262 = sphi 0, %s260
      %s263 = sphi 0, %s262
      %s277 = sphi 0, %s263
      %s281 = sphi 0, %s281
      %s283 = sphi 0, %s281
      %s284 = sphi 0, %s283
      %s298 = sphi 0, %s284
      %s304 = sphi 0, %s306
      %s307 = sphi 0, %s304
      %s308 = sphi 0, %s307
      %s324 = sphi 0, %s308
      %s330 = sphi 0, %s332
      %s333 = sphi 0, %s330
      %s334 = sphi 0, %s333
      %s350 = sphi 0, %s334
      %s356 = sphi 0, %s358
      %s359 = sphi 0, %s356
      %s360 = sphi 0, %s359
      %s376 = sphi 0, %s360
    $region4: #{tpu_custom_call.1} parent=1 // loop_header_branch
      %32 = sbr.rel (%p30) target = $region8
    $region5: #{tpu_custom_call.1} parent=1 // loop_body
      %s34 = ssub.s32 %s29, 1
      %s35 = ssub.s32 %s29, 2
      %s42 = sadd.s32 1, %s37
      %p43 = scmp.ge.s32.totalorder %s42, 3
      %s44 = scalar_select %p43, 0, %s42
      %s45 = sadd.s32 1, %s36
      %s46 = scalar_select %p43, %s45, %s36
      %p47 = scmp.ge.s32.totalorder %s46, 1
      %s48 = scalar_select %p47, 0, %s46
      %s49 = ssub.s32 %s36, %s48
      %p50 = scmp.eq.s32.totalorder %s49, 0
      %s52 = sadd.s32 %s51, 1
      %s53 = scalar_select %p50, %s51, %s52
      %p56 = pneg %p50
      %p57 = scmp.eq.s32.totalorder %s29, 2
      %p58 = por %p56, %p57
      %p59 = scmp.ne.s32.totalorder %s51, %s54
      %p60 = scmp.eq.s32.totalorder %s29, 0
      %p61 = por %p59, %p60
      %p62 = scmp.ne.s32.totalorder %s51, %s54
      %p63 = scmp.eq.s32.totalorder %s34, 2
      %p64 = por %p62, %p63
      %p65 = scmp.ne.s32.totalorder %s54, %s55
      %p66 = scmp.eq.s32.totalorder %s34, 0
      %p67 = por %p65, %p66
      %p68 = scmp.ne.s32.totalorder %s54, %s55
      %p69 = scmp.eq.s32.totalorder %s35, 2
      %p70 = por %p68, %p69
      %p72 = scmp.ne.s32.totalorder %s55, %s71
      %p73 = scmp.eq.s32.totalorder %s35, 0
      %p74 = por %p72, %p73
      %s75 = ssub.s32 %s37, %s44
      %s76 = ssub.s32 %s36, %s48
      %s77 = sor.u32 %s75, %s76
      %p78 = scmp.eq.s32.totalorder %s77, 0
      %s80 = sadd.s32 %s79, 1
      %s81 = scalar_select %p78, %s79, %s80
      %p84 = pneg %p78
      %p85 = scmp.eq.s32.totalorder %s29, 2
      %p86 = por %p84, %p85
      %p87 = scmp.ne.s32.totalorder %s79, %s82
      %p88 = scmp.eq.s32.totalorder %s29, 0
      %p89 = por %p87, %p88
      %p90 = scmp.ne.s32.totalorder %s79, %s82
      %p91 = scmp.eq.s32.totalorder %s34, 2
      %p92 = por %p90, %p91
      %p93 = scmp.ne.s32.totalorder %s82, %s83
      %p94 = scmp.eq.s32.totalorder %s34, 0
      %p95 = por %p93, %p94
      %p96 = scmp.ne.s32.totalorder %s82, %s83
      %p97 = scmp.eq.s32.totalorder %s35, 2
      %p98 = por %p96, %p97
      %p100 = scmp.ne.s32.totalorder %s83, %s99
      %p101 = scmp.eq.s32.totalorder %s35, 0
      %p102 = por %p100, %p101
      %s103 = ssub.s32 %s36, %s48
      %p104 = scmp.eq.s32.totalorder %s103, 0
      %s106 = sadd.s32 %s105, 1
      %s107 = scalar_select %p104, %s105, %s106
      %p110 = pneg %p104
      %p111 = scmp.eq.s32.totalorder %s29, 2
      %p112 = por %p110, %p111
      %p113 = scmp.ne.s32.totalorder %s105, %s108
      %p114 = scmp.eq.s32.totalorder %s29, 0
      %p115 = por %p113, %p114
      %p116 = scmp.ne.s32.totalorder %s105, %s108
      %p117 = scmp.eq.s32.totalorder %s34, 2
      %p118 = por %p116, %p117
      %p119 = scmp.ne.s32.totalorder %s108, %s109
      %p120 = scmp.eq.s32.totalorder %s34, 0
      %p121 = por %p119, %p120
      %p122 = scmp.ne.s32.totalorder %s108, %s109
      %p123 = scmp.eq.s32.totalorder %s35, 2
      %p124 = por %p122, %p123
      %p126 = scmp.ne.s32.totalorder %s109, %s125
      %p127 = scmp.eq.s32.totalorder %s35, 0
      %p128 = por %p126, %p127
      %s129 = ssub.s32 %s36, %s48
      %p130 = scmp.eq.s32.totalorder %s129, 0
      %s132 = sadd.s32 %s131, 1
      %s133 = scalar_select %p130, %s131, %s132
      %p136 = pneg %p130
      %p137 = scmp.eq.s32.totalorder %s29, 2
      %p138 = por %p136, %p137
      %p139 = scmp.ne.s32.totalorder %s131, %s134
      %p140 = scmp.eq.s32.totalorder %s29, 0
      %p141 = por %p139, %p140
      %p142 = scmp.ne.s32.totalorder %s131, %s134
      %p143 = scmp.eq.s32.totalorder %s34, 2
      %p144 = por %p142, %p143
      %p145 = scmp.ne.s32.totalorder %s134, %s135
      %p146 = scmp.eq.s32.totalorder %s34, 0
      %p147 = por %p145, %p146
      %p148 = scmp.ne.s32.totalorder %s134, %s135
      %p149 = scmp.eq.s32.totalorder %s35, 2
      %p150 = por %p148, %p149
      %p152 = scmp.ne.s32.totalorder %s135, %s151
      %p153 = scmp.eq.s32.totalorder %s35, 0
      %p154 = por %p152, %p153
      %s156 = sadd.s32 %s155, 1
      %p159 = scmp.eq.s32.totalorder %s29, 2
      %p160 = scmp.ne.s32.totalorder %s155, %s157
      %p161 = scmp.eq.s32.totalorder %s29, 0
      %p162 = por %p160, %p161
      %p163 = scmp.ne.s32.totalorder %s155, %s157
      %p164 = scmp.eq.s32.totalorder %s34, 2
      %p165 = por %p163, %p164
      %p166 = scmp.ne.s32.totalorder %s157, %s158
      %p167 = scmp.eq.s32.totalorder %s34, 0
      %p168 = por %p166, %p167
      %p169 = scmp.ne.s32.totalorder %s157, %s158
      %p170 = scmp.eq.s32.totalorder %s35, 2
      %p171 = por %p169, %p170
      %p173 = scmp.ne.s32.totalorder %s158, %s172
      %p174 = scmp.eq.s32.totalorder %s35, 0
      %p175 = por %p173, %p174
      %s177 = sadd.s32 %s176, 1
      %p180 = scmp.eq.s32.totalorder %s29, 2
      %p181 = scmp.ne.s32.totalorder %s176, %s178
      %p182 = scmp.eq.s32.totalorder %s29, 0
      %p183 = por %p181, %p182
      %p184 = scmp.ne.s32.totalorder %s176, %s178
      %p185 = scmp.eq.s32.totalorder %s34, 2
      %p186 = por %p184, %p185
      %p187 = scmp.ne.s32.totalorder %s178, %s179
      %p188 = scmp.eq.s32.totalorder %s34, 0
      %p189 = por %p187, %p188
      %p190 = scmp.ne.s32.totalorder %s178, %s179
      %p191 = scmp.eq.s32.totalorder %s35, 2
      %p192 = por %p190, %p191
      %p194 = scmp.ne.s32.totalorder %s179, %s193
      %p195 = scmp.eq.s32.totalorder %s35, 0
      %p196 = por %p194, %p195
      %s198 = sadd.s32 %s197, 1
      %p201 = scmp.eq.s32.totalorder %s29, 2
      %p202 = scmp.ne.s32.totalorder %s197, %s199
      %p203 = scmp.eq.s32.totalorder %s29, 0
      %p204 = por %p202, %p203
      %p205 = scmp.ne.s32.totalorder %s197, %s199
      %p206 = scmp.eq.s32.totalorder %s34, 2
      %p207 = por %p205, %p206
      %p208 = scmp.ne.s32.totalorder %s199, %s200
      %p209 = scmp.eq.s32.totalorder %s34, 0
      %p210 = por %p208, %p209
      %p211 = scmp.ne.s32.totalorder %s199, %s200
      %p212 = scmp.eq.s32.totalorder %s35, 2
      %p213 = por %p211, %p212
      %p215 = scmp.ne.s32.totalorder %s200, %s214
      %p216 = scmp.eq.s32.totalorder %s35, 0
      %p217 = por %p215, %p216
      %s219 = sadd.s32 %s218, 1
      %p222 = scmp.eq.s32.totalorder %s29, 2
      %p223 = scmp.ne.s32.totalorder %s218, %s220
      %p224 = scmp.eq.s32.totalorder %s29, 0
      %p225 = por %p223, %p224
      %p226 = scmp.ne.s32.totalorder %s218, %s220
      %p227 = scmp.eq.s32.totalorder %s34, 2
      %p228 = por %p226, %p227
      %p229 = scmp.ne.s32.totalorder %s220, %s221
      %p230 = scmp.eq.s32.totalorder %s34, 0
      %p231 = por %p229, %p230
      %p232 = scmp.ne.s32.totalorder %s220, %s221
      %p233 = scmp.eq.s32.totalorder %s35, 2
      %p234 = por %p232, %p233
      %p236 = scmp.ne.s32.totalorder %s221, %s235
      %p237 = scmp.eq.s32.totalorder %s35, 0
      %p238 = por %p236, %p237
      %s240 = sadd.s32 %s239, 1
      %p243 = scmp.eq.s32.totalorder %s29, 2
      %p244 = scmp.ne.s32.totalorder %s239, %s241
      %p245 = scmp.eq.s32.totalorder %s29, 0
      %p246 = por %p244, %p245
      %p247 = scmp.ne.s32.totalorder %s239, %s241
      %p248 = scmp.eq.s32.totalorder %s34, 2
      %p249 = por %p247, %p248
      %p250 = scmp.ne.s32.totalorder %s241, %s242
      %p251 = scmp.eq.s32.totalorder %s34, 0
      %p252 = por %p250, %p251
      %p253 = scmp.ne.s32.totalorder %s241, %s242
      %p254 = scmp.eq.s32.totalorder %s35, 2
      %p255 = por %p253, %p254
      %p257 = scmp.ne.s32.totalorder %s242, %s256
      %p258 = scmp.eq.s32.totalorder %s35, 0
      %p259 = por %p257, %p258
      %s261 = sadd.s32 %s260, 1
      %p264 = scmp.eq.s32.totalorder %s29, 2
      %p265 = scmp.ne.s32.totalorder %s260, %s262
      %p266 = scmp.eq.s32.totalorder %s29, 0
      %p267 = por %p265, %p266
      %p268 = scmp.ne.s32.totalorder %s260, %s262
      %p269 = scmp.eq.s32.totalorder %s34, 2
      %p270 = por %p268, %p269
      %p271 = scmp.ne.s32.totalorder %s262, %s263
      %p272 = scmp.eq.s32.totalorder %s34, 0
      %p273 = por %p271, %p272
      %p274 = scmp.ne.s32.totalorder %s262, %s263
      %p275 = scmp.eq.s32.totalorder %s35, 2
      %p276 = por %p274, %p275
      %p278 = scmp.ne.s32.totalorder %s263, %s277
      %p279 = scmp.eq.s32.totalorder %s35, 0
      %p280 = por %p278, %p279
      %s282 = sadd.s32 %s281, 1
      %p285 = scmp.eq.s32.totalorder %s29, 2
      %p286 = scmp.ne.s32.totalorder %s281, %s283
      %p287 = scmp.eq.s32.totalorder %s29, 0
      %p288 = por %p286, %p287
      %p289 = scmp.ne.s32.totalorder %s281, %s283
      %p290 = scmp.eq.s32.totalorder %s34, 2
      %p291 = por %p289, %p290
      %p292 = scmp.ne.s32.totalorder %s283, %s284
      %p293 = scmp.eq.s32.totalorder %s34, 0
      %p294 = por %p292, %p293
      %p295 = scmp.ne.s32.totalorder %s283, %s284
      %p296 = scmp.eq.s32.totalorder %s35, 2
      %p297 = por %p295, %p296
      %p299 = scmp.ne.s32.totalorder %s284, %s298
      %p300 = scmp.eq.s32.totalorder %s35, 0
      %p301 = por %p299, %p300
      %s302 = ssub.s32 %s36, %s48
      %p303 = scmp.eq.s32.totalorder %s302, 0
      %s305 = sadd.s32 %s304, 1
      %s306 = scalar_select %p303, %s304, %s305
      %p309 = pneg %p303
      %p310 = scmp.eq.s32.totalorder %s29, 2
      %p311 = por %p309, %p310
      %p312 = scmp.ne.s32.totalorder %s304, %s307
      %p313 = scmp.eq.s32.totalorder %s29, 0
      %p314 = por %p312, %p313
      %p315 = scmp.ne.s32.totalorder %s304, %s307
      %p316 = scmp.eq.s32.totalorder %s34, 2
      %p317 = por %p315, %p316
      %p318 = scmp.ne.s32.totalorder %s307, %s308
      %p319 = scmp.eq.s32.totalorder %s34, 0
      %p320 = por %p318, %p319
      %p321 = scmp.ne.s32.totalorder %s307, %s308
      %p322 = scmp.eq.s32.totalorder %s35, 2
      %p323 = por %p321, %p322
      %p325 = scmp.ne.s32.totalorder %s308, %s324
      %p326 = scmp.eq.s32.totalorder %s35, 0
      %p327 = por %p325, %p326
      %s328 = ssub.s32 %s36, %s48
      %p329 = scmp.eq.s32.totalorder %s328, 0
      %s331 = sadd.s32 %s330, 1
      %s332 = scalar_select %p329, %s330, %s331
      %p335 = pneg %p329
      %p336 = scmp.eq.s32.totalorder %s29, 2
      %p337 = por %p335, %p336
      %p338 = scmp.ne.s32.totalorder %s330, %s333
      %p339 = scmp.eq.s32.totalorder %s29, 0
      %p340 = por %p338, %p339
      %p341 = scmp.ne.s32.totalorder %s330, %s333
      %p342 = scmp.eq.s32.totalorder %s34, 2
      %p343 = por %p341, %p342
      %p344 = scmp.ne.s32.totalorder %s333, %s334
      %p345 = scmp.eq.s32.totalorder %s34, 0
      %p346 = por %p344, %p345
      %p347 = scmp.ne.s32.totalorder %s333, %s334
      %p348 = scmp.eq.s32.totalorder %s35, 2
      %p349 = por %p347, %p348
      %p351 = scmp.ne.s32.totalorder %s334, %s350
      %p352 = scmp.eq.s32.totalorder %s35, 0
      %p353 = por %p351, %p352
      %s354 = ssub.s32 %s36, %s48
      %p355 = scmp.eq.s32.totalorder %s354, 0
      %s357 = sadd.s32 %s356, 1
      %s358 = scalar_select %p355, %s356, %s357
      %p361 = pneg %p355
      %p362 = scmp.eq.s32.totalorder %s29, 2
      %p363 = por %p361, %p362
      %p364 = scmp.ne.s32.totalorder %s356, %s359
      %p365 = scmp.eq.s32.totalorder %s29, 0
      %p366 = por %p364, %p365
      %p367 = scmp.ne.s32.totalorder %s356, %s359
      %p368 = scmp.eq.s32.totalorder %s34, 2
      %p369 = por %p367, %p368
      %p370 = scmp.ne.s32.totalorder %s359, %s360
      %p371 = scmp.eq.s32.totalorder %s34, 0
      %p372 = por %p370, %p371
      %p373 = scmp.ne.s32.totalorder %s359, %s360
      %p374 = scmp.eq.s32.totalorder %s35, 2
      %p375 = por %p373, %p374
      %p377 = scmp.ne.s32.totalorder %s360, %s376
      %p378 = scmp.eq.s32.totalorder %s35, 0
      %p379 = por %p377, %p378
      %p380 = scmp.le.s32.totalorder 1, %s29
      %p381 = scmp.lt.s32.totalorder %s29, 4
      %p382 = pnand %p380, %p381
      %p383 = pneg %p382
      // Predicated region
      $region9: #{tpu_custom_call.1} parent=5 // pred_check
        _
      $region10: #{tpu_custom_call.1} parent=5 // pred_check_branch
        %385 = sbr.rel (%p382) target = $region12
      $region11: #{tpu_custom_call.1} parent=5 // pred_region
        %s386 = ssub.s32 %s29, 1
        // Predicated region
        $region13: #{tpu_custom_call.1} parent=11 // pred_check
          %p387 = pneg %p67
        $region14: #{tpu_custom_call.1} parent=11 // pred_check_branch
          %389 = sbr.rel (%p387) target = $region16
        $region15: #{tpu_custom_call.1} parent=11 // pred_region
          %p390 = scmp.lt.s32.totalorder %s38, 0
          %s391 = scalar_select %p390, %s38, 0
          %s392 = smul.addr %s391, 2
          %s393 = scalar_lea.vmem %s0, %s392
        $region16: #{tpu_custom_call.1} parent=11 // pred_fallthru
          _
        // Predicated region
        $region17: #{tpu_custom_call.1} parent=11 // pred_check
          %p394 = pneg %p121
        $region18: #{tpu_custom_call.1} parent=11 // pred_check_branch
          %396 = sbr.rel (%p394) target = $region20
        $region19: #{tpu_custom_call.1} parent=11 // pred_region
          %s398 = ssub.s32 32, 32
          %399 = vsyncadd [#allocation10], %s398
          %s400 = smul.addr %s38, 32
          %s401 = scalar_lea.hbm %s2, %s400
          %s403 = sshll.u32 [#allocation9], 4
          %s404 = int_to_ptr.vmem [resolvable:$true] %s403
          %406 = dma.hbm_to_vmem [thread:$0]  %s401, 32, %s404, [#allocation10]
        $region20: #{tpu_custom_call.1} parent=11 // pred_fallthru
          _
        // Predicated region
        $region21: #{tpu_custom_call.1} parent=11 // pred_check
          %p407 = pneg %p147
        $region22: #{tpu_custom_call.1} parent=11 // pred_check_branch
          %409 = sbr.rel (%p407) target = $region24
        $region23: #{tpu_custom_call.1} parent=11 // pred_region
          %s411 = ssub.s32 32, 32
          %412 = vsyncadd [#allocation10], %s411
          %s413 = smul.addr %s38, 32
          %s414 = scalar_lea.hbm %s3, %s413
          %s416 = sshll.u32 [#allocation11], 4
          %s417 = int_to_ptr.vmem [resolvable:$true] %s416
          %419 = dma.hbm_to_vmem [thread:$0]  %s414, 32, %s417, [#allocation10]
        $region24: #{tpu_custom_call.1} parent=11 // pred_fallthru
          _
        // Predicated region
        $region25: #{tpu_custom_call.1} parent=11 // pred_check
          %p420 = pneg %p168
        $region26: #{tpu_custom_call.1} parent=11 // pred_check_branch
          %422 = sbr.rel (%p420) target = $region28
        $region27: #{tpu_custom_call.1} parent=11 // pred_region
          _
        $region28: #{tpu_custom_call.1} parent=11 // pred_fallthru
          _
        // Predicated region
        $region29: #{tpu_custom_call.1} parent=11 // pred_check
          %p423 = pneg %p189
        $region30: #{tpu_custom_call.1} parent=11 // pred_check_branch
          %425 = sbr.rel (%p423) target = $region32
        $region31: #{tpu_custom_call.1} parent=11 // pred_region
          _
        $region32: #{tpu_custom_call.1} parent=11 // pred_fallthru
          _
        // Predicated region
        $region33: #{tpu_custom_call.1} parent=11 // pred_check
          %p426 = pneg %p210
        $region34: #{tpu_custom_call.1} parent=11 // pred_check_branch
          %428 = sbr.rel (%p426) target = $region36
        $region35: #{tpu_custom_call.1} parent=11 // pred_region
          _
        $region36: #{tpu_custom_call.1} parent=11 // pred_fallthru
          _
        // Predicated region
        $region37: #{tpu_custom_call.1} parent=11 // pred_check
          %p429 = pneg %p231
        $region38: #{tpu_custom_call.1} parent=11 // pred_check_branch
          %431 = sbr.rel (%p429) target = $region40
        $region39: #{tpu_custom_call.1} parent=11 // pred_region
          %s433 = ssub.s32 32768, 32768
          %434 = vsyncadd [#allocation13], %s433
          %s435 = sshll.u32 [#allocation12], 4
          %s436 = int_to_ptr.vmem [resolvable:$true] %s435
          %441 = dma.hbm_to_vmem [thread:$0]  %s7, 32768, %s436, [#allocation13], 512, 512, 32
        $region40: #{tpu_custom_call.1} parent=11 // pred_fallthru
          _
        // Predicated region
        $region41: #{tpu_custom_call.1} parent=11 // pred_check
          %p442 = pneg %p252
        $region42: #{tpu_custom_call.1} parent=11 // pred_check_branch
          %444 = sbr.rel (%p442) target = $region44
        $region43: #{tpu_custom_call.1} parent=11 // pred_region
          _
        $region44: #{tpu_custom_call.1} parent=11 // pred_fallthru
          _
        // Predicated region
        $region45: #{tpu_custom_call.1} parent=11 // pred_check
          %p445 = pneg %p273
        $region46: #{tpu_custom_call.1} parent=11 // pred_check_branch
          %447 = sbr.rel (%p445) target = $region48
        $region47: #{tpu_custom_call.1} parent=11 // pred_region
          %s449 = ssub.s32 2048, 2048
          %450 = vsyncadd [#allocation13], %s449
          %s451 = sshll.u32 [#allocation14], 4
          %s452 = int_to_ptr.vmem [resolvable:$true] %s451
          %457 = dma.hbm_to_vmem [thread:$0]  %s9, 2048, %s452, [#allocation13], 128, 128, 8
        $region48: #{tpu_custom_call.1} parent=11 // pred_fallthru
          _
        // Predicated region
        $region49: #{tpu_custom_call.1} parent=11 // pred_check
          %p458 = pneg %p294
        $region50: #{tpu_custom_call.1} parent=11 // pred_check_branch
          %460 = sbr.rel (%p458) target = $region52
        $region51: #{tpu_custom_call.1} parent=11 // pred_region
          %s462 = ssub.s32 16, 16
          %463 = vsyncadd [#allocation16], %s462
          %s465 = sshll.u32 [#allocation15], 4
          %s466 = int_to_ptr.vmem [resolvable:$true] %s465
          %468 = dma.hbm_to_vmem [thread:$0]  %s10, 16, %s466, [#allocation16]
        $region52: #{tpu_custom_call.1} parent=11 // pred_fallthru
          _
      $region12: #{tpu_custom_call.1} parent=5 // pred_fallthru
        _
      %p469 = scmp.lt.s32.totalorder %s29, 3
      // Predicated region
      $region53: #{tpu_custom_call.1} parent=5 // pred_check
        %p470 = pneg %p469
      $region54: #{tpu_custom_call.1} parent=5 // pred_check_branch
        %472 = sbr.rel (%p470) target = $region56
      $region55: #{tpu_custom_call.1} parent=5 // pred_region
        // Predicated region
        $region57: #{tpu_custom_call.1} parent=55 // pred_check
          %p473 = pneg %p89
        $region58: #{tpu_custom_call.1} parent=55 // pred_check_branch
          %475 = sbr.rel (%p473) target = $region60
        $region59: #{tpu_custom_call.1} parent=55 // pred_region
          %s476 = sand.u32 %s79, 1
          %s477 = scalar_lea.sflag [#allocation7], %s476
          %s478 = sand.u32 %s79, 1
          %s479 = smul.addr %s478, 16
          %s480 = scalar_lea.vmem [#allocation6], %s479
          %s481 = smul.u32 4, %s37
          %s483 = ssub.s32 256, 256
          %484 = vsyncadd %s477, %s483
          %s485 = smul.addr %s36, 2
          %s486 = smul.addr %s481, 2
          %s487 = sadd.s32 %s485, %s486
          %s488 = smul.addr %s487, 32
          %s489 = scalar_lea.hbm %s1, %s488
          %s490 = sshll.u32 %s480, 4
          %s491 = int_to_ptr.vmem [resolvable:$true] %s490
          %496 = dma.hbm_to_vmem [thread:$0]  %s489, 256, %s491, %s477, 64, 64, 4
        $region60: #{tpu_custom_call.1} parent=55 // pred_fallthru
          _
      $region56: #{tpu_custom_call.1} parent=5 // pred_fallthru
        _
      %p497 = scmp.le.s32.totalorder 1, %s29
      %p498 = scmp.lt.s32.totalorder %s29, 4
      %p499 = pnand %p497, %p498
      %p500 = pneg %p499
      // Predicated region
      $region61: #{tpu_custom_call.1} parent=5 // pred_check
        _
      $region62: #{tpu_custom_call.1} parent=5 // pred_check_branch
        %502 = sbr.rel (%p499) target = $region64
      $region63: #{tpu_custom_call.1} parent=5 // pred_region
        %s503 = ssub.s32 %s29, 1
        %s504 = sand.u32 %s82, 1
        %s505 = scalar_lea.sflag [#allocation7], %s504
        %s506 = sand.u32 %s82, 1
        %s507 = smul.addr %s506, 16
        %s508 = scalar_lea.vmem [#allocation6], %s507
        // Predicated region
        $region65: #{tpu_custom_call.1} parent=63 // pred_check
          %p509 = pneg %p95
        $region66: #{tpu_custom_call.1} parent=63 // pred_check_branch
          %511 = sbr.rel (%p509) target = $region68
        $region67: #{tpu_custom_call.1} parent=63 // pred_region
          %512 = dma.done %s505, 256
        $region68: #{tpu_custom_call.1} parent=63 // pred_fallthru
          _
        // Predicated region
        $region69: #{tpu_custom_call.1} parent=63 // pred_check
          %p513 = pneg %p121
        $region70: #{tpu_custom_call.1} parent=63 // pred_check_branch
          %515 = sbr.rel (%p513) target = $region72
        $region71: #{tpu_custom_call.1} parent=63 // pred_region
          %516 = dma.done [#allocation10], 32
        $region72: #{tpu_custom_call.1} parent=63 // pred_fallthru
          _
        // Predicated region
        $region73: #{tpu_custom_call.1} parent=63 // pred_check
          %p517 = pneg %p147
        $region74: #{tpu_custom_call.1} parent=63 // pred_check_branch
          %519 = sbr.rel (%p517) target = $region76
        $region75: #{tpu_custom_call.1} parent=63 // pred_region
          %520 = dma.done [#allocation10], 32
        $region76: #{tpu_custom_call.1} parent=63 // pred_fallthru
          _
        // Predicated region
        $region77: #{tpu_custom_call.1} parent=63 // pred_check
          %p521 = pneg %p231
        $region78: #{tpu_custom_call.1} parent=63 // pred_check_branch
          %523 = sbr.rel (%p521) target = $region80
        $region79: #{tpu_custom_call.1} parent=63 // pred_region
          %524 = dma.done [#allocation13], 32768
        $region80: #{tpu_custom_call.1} parent=63 // pred_fallthru
          _
        // Predicated region
        $region81: #{tpu_custom_call.1} parent=63 // pred_check
          %p525 = pneg %p273
        $region82: #{tpu_custom_call.1} parent=63 // pred_check_branch
          %527 = sbr.rel (%p525) target = $region84
        $region83: #{tpu_custom_call.1} parent=63 // pred_region
          %528 = dma.done [#allocation13], 2048
        $region84: #{tpu_custom_call.1} parent=63 // pred_fallthru
          _
        // Predicated region
        $region85: #{tpu_custom_call.1} parent=63 // pred_check
          %p529 = pneg %p294
        $region86: #{tpu_custom_call.1} parent=63 // pred_check_branch
          %531 = sbr.rel (%p529) target = $region88
        $region87: #{tpu_custom_call.1} parent=63 // pred_region
          %532 = dma.done [#allocation16], 16
        $region88: #{tpu_custom_call.1} parent=63 // pred_fallthru
          _
        %p533 = scmp.lt.s32.totalorder %s38, 0
        %s534 = scalar_select %p533, %s38, 0
        %s535 = smul.addr %s534, 2
        %s536 = scalar_lea.vmem %s0, %s535
        %p537 = pneg %p67
        %p538 = pneg %p64
        %s539 = sand.u32 %s82, 1
        %s540 = scalar_lea.sflag [#allocation7], %s539
        %s541 = sand.u32 %s82, 1
        %s542 = smul.addr %s541, 16
        %s543 = scalar_lea.vmem [#allocation6], %s542
        %p544 = pneg %p95
        %p545 = pneg %p92
        %p546 = pneg %p121
        %p547 = pneg %p118
        %p548 = pneg %p147
        %p549 = pneg %p144
        %p550 = pneg %p168
        %p551 = pneg %p165
        %p552 = pneg %p189
        %p553 = pneg %p186
        %p554 = pneg %p210
        %p555 = pneg %p207
        %p556 = pneg %p231
        %p557 = pneg %p228
        %p558 = pneg %p252
        %p559 = pneg %p249
        %p560 = pneg %p273
        %p561 = pneg %p270
        %p562 = pneg %p294
        %p563 = pneg %p291
        %p564 = pneg %p320
        %p565 = pneg %p317
        %p566 = pneg %p346
        %p567 = pneg %p343
        %p568 = pneg %p372
        %p569 = pneg %p369
        %p570 = scmp.lt.s32.totalorder %s38, 0
        %s571 = scalar_select %p570, %s38, 0
        %s572 = smul.addr %s571, 2
        %s573 = scalar_lea.vmem %s0, %s572
        %s574 = smul.u32 4, %s39
        %p575 = scmp.eq.s32.totalorder %s39, 0
        // Predicated region
        $region89: #{tpu_custom_call.1} parent=63 // pred_check
          %p576 = pneg %p575
        $region90: #{tpu_custom_call.1} parent=63 // pred_check_branch
          %578 = sbr.rel (%p576) target = $region92
        $region91: #{tpu_custom_call.1} parent=63 // pred_region
          %vm579 = vcmask 8192
          %580 = vst.msk [vmem:[#allocation2] sm:$0x1] %vm579, 0.0
          %581 = vst.msk [vmem:[#allocation3] sm:$0x1] %vm579, 0.0
          %582 = vst [vmem:[#allocation4] sm:$0xf] 0.0
        $region92: #{tpu_custom_call.1} parent=63 // pred_fallthru
          _
        %v583 = vld [vmem:[%s508] sm:$0xf]
        %v584 = vld [vmem:[%s508 + $0x4] sm:$0xf]
        %v585 = vld [vmem:[%s508 + $0x8] sm:$0xf]
        %v586 = vld [vmem:[%s508 + $0xc] sm:$0xf]
        %v587 = vld [vmem:[#allocation9] sm:$0x3]
        %v588 = vld [vmem:[%s4] sm:$0x1]
        %v590 = vlaneseq
        %v591 = vshrl.u32 %v590, 7
        %v592 = vsub.s32 0, %v591
        %v593 = vrot.slane %v588, %v592
        %v595 = vmul.f32 %v587, %v593
        %vm596 = vcmask 1041408
        %v597 = vsel %vm596, %v595, 0.0
        %598 = vadd.xlane.f32.xlu0 %v597
        %v599 = vpop.xlane.xlu0 %598
        %v600 = vld [vmem:[%s5] sm:$0x3]
        %v602 = vlaneseq
        %v603 = vshrl.u32 %v602, 7
        %v604 = vsub.s32 0, %v603
        %v605 = vrot.slane %v600, %v604
        %v606 = vlaneseq
        %v607 = vshrl.u32 %v606, 7
        %v608 = vsub.s32 1, %v607
        %v609 = vrot.slane %v600, %v608
        %v610 = vcombine.low %v605, %v609
        %v612 = vunpack.c.l.s4 1983009808
        %v613 = vunpack.c.0.s8 %v612
        %v614 = vlaneseq
        %v615 = vshrl.u32 %v614, 7
        %v616 = vsub.s32 %v613, %v615
        %v617 = vrot.slane %v610, %v616
        %v619 = vmul.f32 %v583, %v617
        %v620 = vmul.f32 %v584, %v617
        %v621 = vmul.f32 %v585, %v617
        %v622 = vmul.f32 %v586, %v617
        %v628 = vunpack.c.l.s4 1983009808
        %v629 = vunpack.c.0.s8 %v628
        %v630 = vlaneseq
        %v631 = vshrl.u32 %v630, 7
        %v632 = vsub.s32 %v629, %v631
        %v633 = vrot.slane %v619, %v632
        %v634 = vcombine.high %v633, %v633
        %v636 = vunpack.c.l.s4 1983009808
        %v637 = vunpack.c.0.s8 %v636
        %v638 = vlaneseq
        %v639 = vshrl.u32 %v638, 7
        %v640 = vsub.s32 %v637, %v639
        %v641 = vrot.slane %v620, %v640
        %v642 = vcombine.high %v641, %v641
        %v644 = vunpack.c.l.s4 1983009808
        %v645 = vunpack.c.0.s8 %v644
        %v646 = vlaneseq
        %v647 = vshrl.u32 %v646, 7
        %v648 = vsub.s32 %v645, %v647
        %v649 = vrot.slane %v621, %v648
        %v650 = vcombine.high %v649, %v649
        %v652 = vunpack.c.l.s4 1983009808
        %v653 = vunpack.c.0.s8 %v652
        %v654 = vlaneseq
        %v655 = vshrl.u32 %v654, 7
        %v656 = vsub.s32 %v653, %v655
        %v657 = vrot.slane %v622, %v656
        %v658 = vcombine.high %v657, %v657
        %v667 = vsel %vm596, %v633, 0.0
        %v668 = vsel %vm596, %v634, 0.0
        %v669 = vadd.f32 %v667, %v668
        %670 = vadd.xlane.f32.xlu0 %v669
        %v671 = vpop.xlane.xlu0 %670
        %v672 = vsel %vm596, %v641, 0.0
        %v673 = vsel %vm596, %v642, 0.0
        %v674 = vadd.f32 %v672, %v673
        %675 = vadd.xlane.f32.xlu0 %v674
        %v676 = vpop.xlane.xlu0 %675
        %v677 = vsel %vm596, %v649, 0.0
        %v678 = vsel %vm596, %v650, 0.0
        %v679 = vadd.f32 %v677, %v678
        %680 = vadd.xlane.f32.xlu0 %v679
        %v681 = vpop.xlane.xlu0 %680
        %v682 = vsel %vm596, %v657, 0.0
        %v683 = vsel %vm596, %v658, 0.0
        %v684 = vadd.f32 %v682, %v683
        %685 = vadd.xlane.f32.xlu0 %v684
        %v686 = vpop.xlane.xlu0 %685
        %v687 = vadd.f32 %v671, %v599
        %v688 = vadd.f32 %v676, %v599
        %v689 = vadd.f32 %v681, %v599
        %v690 = vadd.f32 %v686, %v599
        %s691 = sld [smem:[#allocation5]]
        %v692 = vstv %s691
        %v693 = vadd.f32 %v687, %v692
        %v694 = vadd.f32 %v688, %v692
        %v695 = vadd.f32 %v689, %v692
        %v696 = vadd.f32 %v690, %v692
        %v697 = vmax.f32 %v693, 0.0
        %v698 = vmax.f32 %v694, 0.0
        %v699 = vmax.f32 %v695, 0.0
        %v700 = vmax.f32 %v696, 0.0
        %s701 = smul.u32 %s39, 4
        %v702 = vlaneseq
        %v703 = vshrl.u32 %v702, 7
        %v704 = vstv %s701
        %v705 = vadd.s32 %v704, %v703
        %vm706 = vcmp.lt.s32.totalorder %v705, 10
        %v711 = vlaneseq
        %v712 = vand.u32 %v711, 127
        %v713 = vlaneseq
        %v714 = vshrl.u32 %v713, 7
        %v715 = vsub.s32 %v712, %v714
        %v716 = vrot.slane %v697, %v715
        %v717 = vlaneseq
        %v718 = vshrl.u32 %v717, 7
        %v719 = vsub.s32 %v712, %v718
        %v720 = vrot.slane %v698, %v719
        %v721 = vlaneseq
        %v722 = vshrl.u32 %v721, 7
        %v723 = vsub.s32 %v712, %v722
        %v724 = vrot.slane %v699, %v723
        %v725 = vlaneseq
        %v726 = vshrl.u32 %v725, 7
        %v727 = vsub.s32 %v712, %v726
        %v728 = vrot.slane %v700, %v727
        %vm729 = vcmask 1041409
        %v730 = vsel %vm729, %v720, %v716
        %vm731 = vcmask 1042434
        %v732 = vsel %vm731, %v724, %v730
        %vm733 = vcmask 1043459
        %v734 = vsel %vm733, %v728, %v732
        %v736 = vsel %vm706, %v734, -1e+30
        %v737 = vld [vmem:[#allocation2] sm:$0x1]
        %vm738 = vcmask 11264
        %v739 = vsel %vm738, %v736, -inf
        %v740 = vrot.slane %v739, 4
        %v741 = vmax.f32 %v739, %v740
        %v742 = vrot.slane %v741, 2
        %v743 = vmax.f32 %v741, %v742
        %v744 = vrot.slane %v743, 1
        %v745 = vmax.f32 %v743, %v744
        %v746 = vmax.f32 %v737, %v745
        %v747 = vsub.f32 %v737, %v746
        %v748 = vmul.f32 %v747, 1.442695
        %v749 = vpow.pop %v748
        %v751 = vlaneseq
        %v752 = vshrl.u32 %v751, 7
        %v753 = vsub.s32 0, %v752
        %v754 = vrot.slane %v746, %v753
        %v756 = vsub.f32 %v736, %v754
        %v757 = vmul.f32 %v756, 1.442695
        %v758 = vpow.pop %v757
        %v759 = vld [vmem:[#allocation3] sm:$0x1]
        %v760 = vmul.f32 %v749, %v759
        %v761 = vsel %vm738, %v758, 0.0
        %v762 = vrot.slane %v761, 4
        %v763 = vadd.f32 %v761, %v762
        %v764 = vrot.slane %v763, 2
        %v765 = vadd.f32 %v763, %v764
        %v766 = vrot.slane %v765, 1
        %v767 = vadd.f32 %v765, %v766
        %v768 = vadd.f32 %v760, %v767
        %vm769 = vcmask 8192
        %770 = vst.msk [vmem:[#allocation3] sm:$0x1] %vm769, %v768
        %v771 = vlaneseq
        %v772 = vshrl.u32 %v771, 7
        %v773 = vsub.s32 0, %v772
        %v774 = vrot.slane %v749, %v773
        %776 = vbcast.lane.b32.xlu0 %v774, 256
        %v777 = vpop.permute.xlu0 %776
        %v778 = vld [vmem:[#allocation4] sm:$0xf]
        %v781 = vunpack.c.l.s4 1983009808
        %v782 = vunpack.c.0.s8 %v781
        %v783 = vlaneseq
        %v784 = vshrl.u32 %v783, 7
        %v785 = vsub.s32 %v782, %v784
        %v786 = vrot.slane %v778, %v785
        %v787 = vcombine.high %v786, %v786
        %v790 = vmul.f32 %v777, %v786
        %v791 = vmul.f32 %v777, %v787
        %v792 = vlaneseq
        %v793 = vshrl.u32 %v792, 7
        %v794 = vsub.s32 0, %v793
        %v795 = vrot.slane %v758, %v794
        %797 = vbcast.lane.b32.xlu0 %v795, 256
        %v798 = vpop.permute.xlu0 %797
        %v799 = vlaneseq
        %v800 = vshrl.u32 %v799, 7
        %v801 = vsub.s32 1, %v800
        %v802 = vrot.slane %v758, %v801
        %804 = vbcast.lane.b32.xlu0 %v802, 256
        %v805 = vpop.permute.xlu0 %804
        %v806 = vlaneseq
        %v807 = vshrl.u32 %v806, 7
        %v808 = vsub.s32 2, %v807
        %v809 = vrot.slane %v758, %v808
        %811 = vbcast.lane.b32.xlu0 %v809, 256
        %v812 = vpop.permute.xlu0 %811
        %v813 = vlaneseq
        %v814 = vshrl.u32 %v813, 7
        %v815 = vsub.s32 3, %v814
        %v816 = vrot.slane %v758, %v815
        %818 = vbcast.lane.b32.xlu0 %v816, 256
        %v819 = vpop.permute.xlu0 %818
        %v825 = vunpack.c.l.s4 1983009808
        %v826 = vunpack.c.0.s8 %v825
        %v827 = vlaneseq
        %v828 = vshrl.u32 %v827, 7
        %v829 = vsub.s32 %v826, %v828
        %v830 = vrot.slane %v583, %v829
        %v831 = vcombine.high %v830, %v830
        %v833 = vunpack.c.l.s4 1983009808
        %v834 = vunpack.c.0.s8 %v833
        %v835 = vlaneseq
        %v836 = vshrl.u32 %v835, 7
        %v837 = vsub.s32 %v834, %v836
        %v838 = vrot.slane %v584, %v837
        %v839 = vcombine.high %v838, %v838
        %v841 = vunpack.c.l.s4 1983009808
        %v842 = vunpack.c.0.s8 %v841
        %v843 = vlaneseq
        %v844 = vshrl.u32 %v843, 7
        %v845 = vsub.s32 %v842, %v844
        %v846 = vrot.slane %v585, %v845
        %v847 = vcombine.high %v846, %v846
        %v849 = vunpack.c.l.s4 1983009808
        %v850 = vunpack.c.0.s8 %v849
        %v851 = vlaneseq
        %v852 = vshrl.u32 %v851, 7
        %v853 = vsub.s32 %v850, %v852
        %v854 = vrot.slane %v586, %v853
        %v855 = vcombine.high %v854, %v854
        %v864 = vmul.f32 %v798, %v830
        %v865 = vmul.f32 %v798, %v831
        %v866 = vmul.f32 %v805, %v838
        %v867 = vmul.f32 %v805, %v839
        %v868 = vmul.f32 %v812, %v846
        %v869 = vmul.f32 %v812, %v847
        %v870 = vmul.f32 %v819, %v854
        %v871 = vmul.f32 %v819, %v855
        %v872 = vsel %vm596, %v864, 0.0
        %v873 = vsel %vm596, %v866, 0.0
        %v874 = vadd.f32 %v872, %v873
        %v875 = vsel %vm596, %v868, 0.0
        %v876 = vadd.f32 %v874, %v875
        %v877 = vsel %vm596, %v870, 0.0
        %v878 = vadd.f32 %v876, %v877
        %v879 = vsel %vm596, %v865, 0.0
        %v880 = vsel %vm596, %v867, 0.0
        %v881 = vadd.f32 %v879, %v880
        %v882 = vsel %vm596, %v869, 0.0
        %v883 = vadd.f32 %v881, %v882
        %v884 = vsel %vm596, %v871, 0.0
        %v885 = vadd.f32 %v883, %v884
        %v886 = vadd.f32 %v790, %v878
        %v887 = vadd.f32 %v791, %v885
        %v890 = vcombine.low %v886, %v887
        %v892 = vunpack.c.l.s4 1983009808
        %v893 = vunpack.c.0.s8 %v892
        %v894 = vlaneseq
        %v895 = vshrl.u32 %v894, 7
        %v896 = vsub.s32 %v893, %v895
        %v897 = vrot.slane %v890, %v896
        %899 = vst [vmem:[#allocation4] sm:$0xf] %v897
        %900 = vst.msk [vmem:[#allocation2] sm:$0x1] %vm769, %v746
        %p901 = scmp.eq.s32.totalorder %s39, 2
        // Predicated region
        $region93: #{tpu_custom_call.1} parent=63 // pred_check
          %p902 = pneg %p901
        $region94: #{tpu_custom_call.1} parent=63 // pred_check_branch
          %904 = sbr.rel (%p902) target = $region96
        $region95: #{tpu_custom_call.1} parent=63 // pred_region
          %v905 = vld [vmem:[#allocation3] sm:$0x1]
          %v906 = vrcp.pop %v905
          %v907 = vmul.f32 %v905, %v906
          %v908 = vsub.f32 2.0, %v907
          %v909 = vmul.f32 %v906, %v908
          %v910 = vld [vmem:[#allocation4] sm:$0xf]
          %v911 = vlaneseq
          %v912 = vshrl.u32 %v911, 7
          %v913 = vsub.s32 0, %v912
          %v914 = vrot.slane %v909, %v913
          %916 = vbcast.lane.b32.xlu0 %v914, 256
          %v917 = vpop.permute.xlu0 %916
          %v920 = vunpack.c.l.s4 269488144
          %v921 = vunpack.c.0.s8 %v920
          %v922 = vlaneseq
          %v923 = vshrl.u32 %v922, 7
          %v924 = vsub.s32 %v921, %v923
          %v925 = vrot.slane %v917, %v924
          %v927 = vmul.f32 %v910, %v925
          %v928 = vld [vmem:[%s573] sm:$0x3]
          %v931 = vunpack.c.l.s4 1983009808
          %v932 = vunpack.c.0.s8 %v931
          %v933 = vlaneseq
          %v934 = vshrl.u32 %v933, 7
          %v935 = vsub.s32 %v932, %v934
          %v936 = vrot.slane %v927, %v935
          %v937 = vcombine.high %v936, %v936
          %v940 = vld [vmem:[#allocation12] sm:$0xff]
          %v941 = vld [vmem:[#allocation12 + $0x8] sm:$0xff]
          %v942 = vld [vmem:[#allocation12 + $0x10] sm:$0xff]
          %v943 = vld [vmem:[#allocation12 + $0x18] sm:$0xff]
          %v944 = vld [vmem:[#allocation12 + $0x20] sm:$0xff]
          %v945 = vld [vmem:[#allocation12 + $0x28] sm:$0xff]
          %v946 = vld [vmem:[#allocation12 + $0x30] sm:$0xff]
          %v947 = vld [vmem:[#allocation12 + $0x38] sm:$0xff]
          %v948 = vld [vmem:[#allocation12 + $0x40] sm:$0xff]
          %v949 = vld [vmem:[#allocation12 + $0x48] sm:$0xff]
          %v950 = vld [vmem:[#allocation12 + $0x50] sm:$0xff]
          %v951 = vld [vmem:[#allocation12 + $0x58] sm:$0xff]
          %v952 = vld [vmem:[#allocation12 + $0x60] sm:$0xff]
          %v953 = vld [vmem:[#allocation12 + $0x68] sm:$0xff]
          %v954 = vld [vmem:[#allocation12 + $0x70] sm:$0xff]
          %v955 = vld [vmem:[#allocation12 + $0x78] sm:$0xff]
          %v956 = vld [vmem:[#allocation12 + $0x80] sm:$0xff]
          %v957 = vld [vmem:[#allocation12 + $0x88] sm:$0xff]
          %v958 = vld [vmem:[#allocation12 + $0x90] sm:$0xff]
          %v959 = vld [vmem:[#allocation12 + $0x98] sm:$0xff]
          %v960 = vld [vmem:[#allocation12 + $0xa0] sm:$0xff]
          %v961 = vld [vmem:[#allocation12 + $0xa8] sm:$0xff]
          %v962 = vld [vmem:[#allocation12 + $0xb0] sm:$0xff]
          %v963 = vld [vmem:[#allocation12 + $0xb8] sm:$0xff]
          %v964 = vld [vmem:[#allocation12 + $0xc0] sm:$0xff]
          %v965 = vld [vmem:[#allocation12 + $0xc8] sm:$0xff]
          %v966 = vld [vmem:[#allocation12 + $0xd0] sm:$0xff]
          %v967 = vld [vmem:[#allocation12 + $0xd8] sm:$0xff]
          %v968 = vld [vmem:[#allocation12 + $0xe0] sm:$0xff]
          %v969 = vld [vmem:[#allocation12 + $0xe8] sm:$0xff]
          %v970 = vld [vmem:[#allocation12 + $0xf0] sm:$0xff]
          %v971 = vld [vmem:[#allocation12 + $0xf8] sm:$0xff]
          %v972 = vld [vmem:[#allocation12 + $0x100] sm:$0xff]
          %v973 = vld [vmem:[#allocation12 + $0x108] sm:$0xff]
          %v974 = vld [vmem:[#allocation12 + $0x110] sm:$0xff]
          %v975 = vld [vmem:[#allocation12 + $0x118] sm:$0xff]
          %v976 = vld [vmem:[#allocation12 + $0x120] sm:$0xff]
          %v977 = vld [vmem:[#allocation12 + $0x128] sm:$0xff]
          %v978 = vld [vmem:[#allocation12 + $0x130] sm:$0xff]
          %v979 = vld [vmem:[#allocation12 + $0x138] sm:$0xff]
          %v980 = vld [vmem:[#allocation12 + $0x140] sm:$0xff]
          %v981 = vld [vmem:[#allocation12 + $0x148] sm:$0xff]
          %v982 = vld [vmem:[#allocation12 + $0x150] sm:$0xff]
          %v983 = vld [vmem:[#allocation12 + $0x158] sm:$0xff]
          %v984 = vld [vmem:[#allocation12 + $0x160] sm:$0xff]
          %v985 = vld [vmem:[#allocation12 + $0x168] sm:$0xff]
          %v986 = vld [vmem:[#allocation12 + $0x170] sm:$0xff]
          %v987 = vld [vmem:[#allocation12 + $0x178] sm:$0xff]
          %v988 = vld [vmem:[#allocation12 + $0x180] sm:$0xff]
          %v989 = vld [vmem:[#allocation12 + $0x188] sm:$0xff]
          %v990 = vld [vmem:[#allocation12 + $0x190] sm:$0xff]
          %v991 = vld [vmem:[#allocation12 + $0x198] sm:$0xff]
          %v992 = vld [vmem:[#allocation12 + $0x1a0] sm:$0xff]
          %v993 = vld [vmem:[#allocation12 + $0x1a8] sm:$0xff]
          %v994 = vld [vmem:[#allocation12 + $0x1b0] sm:$0xff]
          %v995 = vld [vmem:[#allocation12 + $0x1b8] sm:$0xff]
          %v996 = vld [vmem:[#allocation12 + $0x1c0] sm:$0xff]
          %v997 = vld [vmem:[#allocation12 + $0x1c8] sm:$0xff]
          %v998 = vld [vmem:[#allocation12 + $0x1d0] sm:$0xff]
          %v999 = vld [vmem:[#allocation12 + $0x1d8] sm:$0xff]
          %v1000 = vld [vmem:[#allocation12 + $0x1e0] sm:$0xff]
          %v1001 = vld [vmem:[#allocation12 + $0x1e8] sm:$0xff]
          %v1002 = vld [vmem:[#allocation12 + $0x1f0] sm:$0xff]
          %v1003 = vld [vmem:[#allocation12 + $0x1f8] sm:$0xff]
          %v1004 = vld [vmem:[#allocation12 + $0x200] sm:$0xff]
          %v1005 = vld [vmem:[#allocation12 + $0x208] sm:$0xff]
          %v1006 = vld [vmem:[#allocation12 + $0x210] sm:$0xff]
          %v1007 = vld [vmem:[#allocation12 + $0x218] sm:$0xff]
          %v1008 = vld [vmem:[#allocation12 + $0x220] sm:$0xff]
          %v1009 = vld [vmem:[#allocation12 + $0x228] sm:$0xff]
          %v1010 = vld [vmem:[#allocation12 + $0x230] sm:$0xff]
          %v1011 = vld [vmem:[#allocation12 + $0x238] sm:$0xff]
          %v1012 = vld [vmem:[#allocation12 + $0x240] sm:$0xff]
          %v1013 = vld [vmem:[#allocation12 + $0x248] sm:$0xff]
          %v1014 = vld [vmem:[#allocation12 + $0x250] sm:$0xff]
          %v1015 = vld [vmem:[#allocation12 + $0x258] sm:$0xff]
          %v1016 = vld [vmem:[#allocation12 + $0x260] sm:$0xff]
          %v1017 = vld [vmem:[#allocation12 + $0x268] sm:$0xff]
          %v1018 = vld [vmem:[#allocation12 + $0x270] sm:$0xff]
          %v1019 = vld [vmem:[#allocation12 + $0x278] sm:$0xff]
          %v1020 = vld [vmem:[#allocation12 + $0x280] sm:$0xff]
          %v1021 = vld [vmem:[#allocation12 + $0x288] sm:$0xff]
          %v1022 = vld [vmem:[#allocation12 + $0x290] sm:$0xff]
          %v1023 = vld [vmem:[#allocation12 + $0x298] sm:$0xff]
          %v1024 = vld [vmem:[#allocation12 + $0x2a0] sm:$0xff]
          %v1025 = vld [vmem:[#allocation12 + $0x2a8] sm:$0xff]
          %v1026 = vld [vmem:[#allocation12 + $0x2b0] sm:$0xff]
          %v1027 = vld [vmem:[#allocation12 + $0x2b8] sm:$0xff]
          %v1028 = vld [vmem:[#allocation12 + $0x2c0] sm:$0xff]
          %v1029 = vld [vmem:[#allocation12 + $0x2c8] sm:$0xff]
          %v1030 = vld [vmem:[#allocation12 + $0x2d0] sm:$0xff]
          %v1031 = vld [vmem:[#allocation12 + $0x2d8] sm:$0xff]
          %v1032 = vld [vmem:[#allocation12 + $0x2e0] sm:$0xff]
          %v1033 = vld [vmem:[#allocation12 + $0x2e8] sm:$0xff]
          %v1034 = vld [vmem:[#allocation12 + $0x2f0] sm:$0xff]
          %v1035 = vld [vmem:[#allocation12 + $0x2f8] sm:$0xff]
          %v1036 = vld [vmem:[#allocation12 + $0x300] sm:$0xff]
          %v1037 = vld [vmem:[#allocation12 + $0x308] sm:$0xff]
          %v1038 = vld [vmem:[#allocation12 + $0x310] sm:$0xff]
          %v1039 = vld [vmem:[#allocation12 + $0x318] sm:$0xff]
          %v1040 = vld [vmem:[#allocation12 + $0x320] sm:$0xff]
          %v1041 = vld [vmem:[#allocation12 + $0x328] sm:$0xff]
          %v1042 = vld [vmem:[#allocation12 + $0x330] sm:$0xff]
          %v1043 = vld [vmem:[#allocation12 + $0x338] sm:$0xff]
          %v1044 = vld [vmem:[#allocation12 + $0x340] sm:$0xff]
          %v1045 = vld [vmem:[#allocation12 + $0x348] sm:$0xff]
          %v1046 = vld [vmem:[#allocation12 + $0x350] sm:$0xff]
          %v1047 = vld [vmem:[#allocation12 + $0x358] sm:$0xff]
          %v1048 = vld [vmem:[#allocation12 + $0x360] sm:$0xff]
          %v1049 = vld [vmem:[#allocation12 + $0x368] sm:$0xff]
          %v1050 = vld [vmem:[#allocation12 + $0x370] sm:$0xff]
          %v1051 = vld [vmem:[#allocation12 + $0x378] sm:$0xff]
          %v1052 = vld [vmem:[#allocation12 + $0x380] sm:$0xff]
          %v1053 = vld [vmem:[#allocation12 + $0x388] sm:$0xff]
          %v1054 = vld [vmem:[#allocation12 + $0x390] sm:$0xff]
          %v1055 = vld [vmem:[#allocation12 + $0x398] sm:$0xff]
          %v1056 = vld [vmem:[#allocation12 + $0x3a0] sm:$0xff]
          %v1057 = vld [vmem:[#allocation12 + $0x3a8] sm:$0xff]
          %v1058 = vld [vmem:[#allocation12 + $0x3b0] sm:$0xff]
          %v1059 = vld [vmem:[#allocation12 + $0x3b8] sm:$0xff]
          %v1060 = vld [vmem:[#allocation12 + $0x3c0] sm:$0xff]
          %v1061 = vld [vmem:[#allocation12 + $0x3c8] sm:$0xff]
          %v1062 = vld [vmem:[#allocation12 + $0x3d0] sm:$0xff]
          %v1063 = vld [vmem:[#allocation12 + $0x3d8] sm:$0xff]
          %v1064 = vld [vmem:[#allocation12 + $0x3e0] sm:$0xff]
          %v1065 = vld [vmem:[#allocation12 + $0x3e8] sm:$0xff]
          %v1066 = vld [vmem:[#allocation12 + $0x3f0] sm:$0xff]
          %v1067 = vld [vmem:[#allocation12 + $0x3f8] sm:$0xff]
          %v1068 = vld [vmem:[#allocation12 + $0x400] sm:$0xff]
          %v1069 = vld [vmem:[#allocation12 + $0x408] sm:$0xff]
          %v1070 = vld [vmem:[#allocation12 + $0x410] sm:$0xff]
          %v1071 = vld [vmem:[#allocation12 + $0x418] sm:$0xff]
          %v1072 = vld [vmem:[#allocation12 + $0x420] sm:$0xff]
          %v1073 = vld [vmem:[#allocation12 + $0x428] sm:$0xff]
          %v1074 = vld [vmem:[#allocation12 + $0x430] sm:$0xff]
          %v1075 = vld [vmem:[#allocation12 + $0x438] sm:$0xff]
          %v1076 = vld [vmem:[#allocation12 + $0x440] sm:$0xff]
          %v1077 = vld [vmem:[#allocation12 + $0x448] sm:$0xff]
          %v1078 = vld [vmem:[#allocation12 + $0x450] sm:$0xff]
          %v1079 = vld [vmem:[#allocation12 + $0x458] sm:$0xff]
          %v1080 = vld [vmem:[#allocation12 + $0x460] sm:$0xff]
          %v1081 = vld [vmem:[#allocation12 + $0x468] sm:$0xff]
          %v1082 = vld [vmem:[#allocation12 + $0x470] sm:$0xff]
          %v1083 = vld [vmem:[#allocation12 + $0x478] sm:$0xff]
          %v1084 = vld [vmem:[#allocation12 + $0x480] sm:$0xff]
          %v1085 = vld [vmem:[#allocation12 + $0x488] sm:$0xff]
          %v1086 = vld [vmem:[#allocation12 + $0x490] sm:$0xff]
          %v1087 = vld [vmem:[#allocation12 + $0x498] sm:$0xff]
          %v1088 = vld [vmem:[#allocation12 + $0x4a0] sm:$0xff]
          %v1089 = vld [vmem:[#allocation12 + $0x4a8] sm:$0xff]
          %v1090 = vld [vmem:[#allocation12 + $0x4b0] sm:$0xff]
          %v1091 = vld [vmem:[#allocation12 + $0x4b8] sm:$0xff]
          %v1092 = vld [vmem:[#allocation12 + $0x4c0] sm:$0xff]
          %v1093 = vld [vmem:[#allocation12 + $0x4c8] sm:$0xff]
          %v1094 = vld [vmem:[#allocation12 + $0x4d0] sm:$0xff]
          %v1095 = vld [vmem:[#allocation12 + $0x4d8] sm:$0xff]
          %v1096 = vld [vmem:[#allocation12 + $0x4e0] sm:$0xff]
          %v1097 = vld [vmem:[#allocation12 + $0x4e8] sm:$0xff]
          %v1098 = vld [vmem:[#allocation12 + $0x4f0] sm:$0xff]
          %v1099 = vld [vmem:[#allocation12 + $0x4f8] sm:$0xff]
          %v1100 = vld [vmem:[#allocation12 + $0x500] sm:$0xff]
          %v1101 = vld [vmem:[#allocation12 + $0x508] sm:$0xff]
          %v1102 = vld [vmem:[#allocation12 + $0x510] sm:$0xff]
          %v1103 = vld [vmem:[#allocation12 + $0x518] sm:$0xff]
          %v1104 = vld [vmem:[#allocation12 + $0x520] sm:$0xff]
          %v1105 = vld [vmem:[#allocation12 + $0x528] sm:$0xff]
          %v1106 = vld [vmem:[#allocation12 + $0x530] sm:$0xff]
          %v1107 = vld [vmem:[#allocation12 + $0x538] sm:$0xff]
          %v1108 = vld [vmem:[#allocation12 + $0x540] sm:$0xff]
          %v1109 = vld [vmem:[#allocation12 + $0x548] sm:$0xff]
          %v1110 = vld [vmem:[#allocation12 + $0x550] sm:$0xff]
          %v1111 = vld [vmem:[#allocation12 + $0x558] sm:$0xff]
          %v1112 = vld [vmem:[#allocation12 + $0x560] sm:$0xff]
          %v1113 = vld [vmem:[#allocation12 + $0x568] sm:$0xff]
          %v1114 = vld [vmem:[#allocation12 + $0x570] sm:$0xff]
          %v1115 = vld [vmem:[#allocation12 + $0x578] sm:$0xff]
          %v1116 = vld [vmem:[#allocation12 + $0x580] sm:$0xff]
          %v1117 = vld [vmem:[#allocation12 + $0x588] sm:$0xff]
          %v1118 = vld [vmem:[#allocation12 + $0x590] sm:$0xff]
          %v1119 = vld [vmem:[#allocation12 + $0x598] sm:$0xff]
          %v1120 = vld [vmem:[#allocation12 + $0x5a0] sm:$0xff]
          %v1121 = vld [vmem:[#allocation12 + $0x5a8] sm:$0xff]
          %v1122 = vld [vmem:[#allocation12 + $0x5b0] sm:$0xff]
          %v1123 = vld [vmem:[#allocation12 + $0x5b8] sm:$0xff]
          %v1124 = vld [vmem:[#allocation12 + $0x5c0] sm:$0xff]
          %v1125 = vld [vmem:[#allocation12 + $0x5c8] sm:$0xff]
          %v1126 = vld [vmem:[#allocation12 + $0x5d0] sm:$0xff]
          %v1127 = vld [vmem:[#allocation12 + $0x5d8] sm:$0xff]
          %v1128 = vld [vmem:[#allocation12 + $0x5e0] sm:$0xff]
          %v1129 = vld [vmem:[#allocation12 + $0x5e8] sm:$0xff]
          %v1130 = vld [vmem:[#allocation12 + $0x5f0] sm:$0xff]
          %v1131 = vld [vmem:[#allocation12 + $0x5f8] sm:$0xff]
          %v1132 = vld [vmem:[#allocation12 + $0x600] sm:$0xff]
          %v1133 = vld [vmem:[#allocation12 + $0x608] sm:$0xff]
          %v1134 = vld [vmem:[#allocation12 + $0x610] sm:$0xff]
          %v1135 = vld [vmem:[#allocation12 + $0x618] sm:$0xff]
          %v1136 = vld [vmem:[#allocation12 + $0x620] sm:$0xff]
          %v1137 = vld [vmem:[#allocation12 + $0x628] sm:$0xff]
          %v1138 = vld [vmem:[#allocation12 + $0x630] sm:$0xff]
          %v1139 = vld [vmem:[#allocation12 + $0x638] sm:$0xff]
          %v1140 = vld [vmem:[#allocation12 + $0x640] sm:$0xff]
          %v1141 = vld [vmem:[#allocation12 + $0x648] sm:$0xff]
          %v1142 = vld [vmem:[#allocation12 + $0x650] sm:$0xff]
          %v1143 = vld [vmem:[#allocation12 + $0x658] sm:$0xff]
          %v1144 = vld [vmem:[#allocation12 + $0x660] sm:$0xff]
          %v1145 = vld [vmem:[#allocation12 + $0x668] sm:$0xff]
          %v1146 = vld [vmem:[#allocation12 + $0x670] sm:$0xff]
          %v1147 = vld [vmem:[#allocation12 + $0x678] sm:$0xff]
          %v1148 = vld [vmem:[#allocation12 + $0x680] sm:$0xff]
          %v1149 = vld [vmem:[#allocation12 + $0x688] sm:$0xff]
          %v1150 = vld [vmem:[#allocation12 + $0x690] sm:$0xff]
          %v1151 = vld [vmem:[#allocation12 + $0x698] sm:$0xff]
          %v1152 = vld [vmem:[#allocation12 + $0x6a0] sm:$0xff]
          %v1153 = vld [vmem:[#allocation12 + $0x6a8] sm:$0xff]
          %v1154 = vld [vmem:[#allocation12 + $0x6b0] sm:$0xff]
          %v1155 = vld [vmem:[#allocation12 + $0x6b8] sm:$0xff]
          %v1156 = vld [vmem:[#allocation12 + $0x6c0] sm:$0xff]
          %v1157 = vld [vmem:[#allocation12 + $0x6c8] sm:$0xff]
          %v1158 = vld [vmem:[#allocation12 + $0x6d0] sm:$0xff]
          %v1159 = vld [vmem:[#allocation12 + $0x6d8] sm:$0xff]
          %v1160 = vld [vmem:[#allocation12 + $0x6e0] sm:$0xff]
          %v1161 = vld [vmem:[#allocation12 + $0x6e8] sm:$0xff]
          %v1162 = vld [vmem:[#allocation12 + $0x6f0] sm:$0xff]
          %v1163 = vld [vmem:[#allocation12 + $0x6f8] sm:$0xff]
          %v1164 = vld [vmem:[#allocation12 + $0x700] sm:$0xff]
          %v1165 = vld [vmem:[#allocation12 + $0x708] sm:$0xff]
          %v1166 = vld [vmem:[#allocation12 + $0x710] sm:$0xff]
          %v1167 = vld [vmem:[#allocation12 + $0x718] sm:$0xff]
          %v1168 = vld [vmem:[#allocation12 + $0x720] sm:$0xff]
          %v1169 = vld [vmem:[#allocation12 + $0x728] sm:$0xff]
          %v1170 = vld [vmem:[#allocation12 + $0x730] sm:$0xff]
          %v1171 = vld [vmem:[#allocation12 + $0x738] sm:$0xff]
          %v1172 = vld [vmem:[#allocation12 + $0x740] sm:$0xff]
          %v1173 = vld [vmem:[#allocation12 + $0x748] sm:$0xff]
          %v1174 = vld [vmem:[#allocation12 + $0x750] sm:$0xff]
          %v1175 = vld [vmem:[#allocation12 + $0x758] sm:$0xff]
          %v1176 = vld [vmem:[#allocation12 + $0x760] sm:$0xff]
          %v1177 = vld [vmem:[#allocation12 + $0x768] sm:$0xff]
          %v1178 = vld [vmem:[#allocation12 + $0x770] sm:$0xff]
          %v1179 = vld [vmem:[#allocation12 + $0x778] sm:$0xff]
          %v1180 = vld [vmem:[#allocation12 + $0x780] sm:$0xff]
          %v1181 = vld [vmem:[#allocation12 + $0x788] sm:$0xff]
          %v1182 = vld [vmem:[#allocation12 + $0x790] sm:$0xff]
          %v1183 = vld [vmem:[#allocation12 + $0x798] sm:$0xff]
          %v1184 = vld [vmem:[#allocation12 + $0x7a0] sm:$0xff]
          %v1185 = vld [vmem:[#allocation12 + $0x7a8] sm:$0xff]
          %v1186 = vld [vmem:[#allocation12 + $0x7b0] sm:$0xff]
          %v1187 = vld [vmem:[#allocation12 + $0x7b8] sm:$0xff]
          %v1188 = vld [vmem:[#allocation12 + $0x7c0] sm:$0xff]
          %v1189 = vld [vmem:[#allocation12 + $0x7c8] sm:$0xff]
          %v1190 = vld [vmem:[#allocation12 + $0x7d0] sm:$0xff]
          %v1191 = vld [vmem:[#allocation12 + $0x7d8] sm:$0xff]
          %v1192 = vld [vmem:[#allocation12 + $0x7e0] sm:$0xff]
          %v1193 = vld [vmem:[#allocation12 + $0x7e8] sm:$0xff]
          %v1194 = vld [vmem:[#allocation12 + $0x7f0] sm:$0xff]
          %v1195 = vld [vmem:[#allocation12 + $0x7f8] sm:$0xff]
          %v1196 = vld [vmem:[%s8] sm:$0xf]
          %v1198 = vlaneseq
          %v1199 = vshrl.u32 %v1198, 7
          %v1200 = vsub.s32 0, %v1199
          %v1201 = vrot.slane %v1196, %v1200
          %v1202 = vlaneseq
          %v1203 = vshrl.u32 %v1202, 7
          %v1204 = vsub.s32 1, %v1203
          %v1205 = vrot.slane %v1196, %v1204
          %v1206 = vlaneseq
          %v1207 = vshrl.u32 %v1206, 7
          %v1208 = vsub.s32 2, %v1207
          %v1209 = vrot.slane %v1196, %v1208
          %v1210 = vlaneseq
          %v1211 = vshrl.u32 %v1210, 7
          %v1212 = vsub.s32 3, %v1211
          %v1213 = vrot.slane %v1196, %v1212
          %1218 = vmatprep.subr.mxu0 %v941
          %1219 = vmatpush1.msra.mxu0 %v940
          %1220 = vmatprep.subr.mxu0 %v945
          %1221 = vmatpush1.msra.mxu0 %v944
          %1222 = vmatprep.subr.mxu0 %v949
          %1223 = vmatpush1.msra.mxu0 %v948
          %1224 = vmatprep.subr.mxu0 %v953
          %1225 = vmatpush1.msra.mxu0 %v952
          %1226 = vmatprep.subr.mxu0 %v957
          %1227 = vmatpush1.msra.mxu0 %v956
          %1228 = vmatprep.subr.mxu0 %v961
          %1229 = vmatpush1.msra.mxu0 %v960
          %1230 = vmatprep.subr.mxu0 %v965
          %1231 = vmatpush1.msra.mxu0 %v964
          %1232 = vmatprep.subr.mxu0 %v969
          %1233 = vmatpush1.msra.mxu0 %v968
          %1234 = vmatprep.subr.mxu0 %v973
          %1235 = vmatpush1.msra.mxu0 %v972
          %1236 = vmatprep.subr.mxu0 %v977
          %1237 = vmatpush1.msra.mxu0 %v976
          %1238 = vmatprep.subr.mxu0 %v981
          %1239 = vmatpush1.msra.mxu0 %v980
          %1240 = vmatprep.subr.mxu0 %v985
          %1241 = vmatpush1.msra.mxu0 %v984
          %1242 = vmatprep.subr.mxu0 %v989
          %1243 = vmatpush1.msra.mxu0 %v988
          %1244 = vmatprep.subr.mxu0 %v993
          %1245 = vmatpush1.msra.mxu0 %v992
          %1246 = vmatprep.subr.mxu0 %v997
          %1247 = vmatpush1.msra.mxu0 %v996
          %1248 = vmatprep.subr.mxu0 %v1001
          %1249 = vmatpush1.msra.mxu0 %v1000
          %1250 = vmatprep.subr.mxu0 %v1005
          %1251 = vmatpush1.msra.mxu0 %v1004
          %1252 = vmatprep.subr.mxu0 %v1009
          %1253 = vmatpush1.msra.mxu0 %v1008
          %1254 = vmatprep.subr.mxu0 %v1013
          %1255 = vmatpush1.msra.mxu0 %v1012
          %1256 = vmatprep.subr.mxu0 %v1017
          %1257 = vmatpush1.msra.mxu0 %v1016
          %1258 = vmatprep.subr.mxu0 %v1021
          %1259 = vmatpush1.msra.mxu0 %v1020
          %1260 = vmatprep.subr.mxu0 %v1025
          %1261 = vmatpush1.msra.mxu0 %v1024
          %1262 = vmatprep.subr.mxu0 %v1029
          %1263 = vmatpush1.msra.mxu0 %v1028
          %1264 = vmatprep.subr.mxu0 %v1033
          %1265 = vmatpush1.msra.mxu0 %v1032
          %1266 = vmatprep.subr.mxu0 %v1037
          %1267 = vmatpush1.msra.mxu0 %v1036
          %1268 = vmatprep.subr.mxu0 %v1041
          %1269 = vmatpush1.msra.mxu0 %v1040
          %1270 = vmatprep.subr.mxu0 %v1045
          %1271 = vmatpush1.msra.mxu0 %v1044
          %1272 = vmatprep.subr.mxu0 %v1049
          %1273 = vmatpush1.msra.mxu0 %v1048
          %1274 = vmatprep.subr.mxu0 %v1053
          %1275 = vmatpush1.msra.mxu0 %v1052
          %1276 = vmatprep.subr.mxu0 %v1057
          %1277 = vmatpush1.msra.mxu0 %v1056
          %1278 = vmatprep.subr.mxu0 %v1061
          %1279 = vmatpush1.msra.mxu0 %v1060
          %1280 = vmatprep.subr.mxu0 %v1065
          %1281 = vmatpush1.msra.mxu0 %v1064
          %1282 = vmatprep.mubr.f32.mxu0 %v937
          %1283 = vmatmul.mubr.f32.gmra.mrb[0].mxu0 %v936
          %v1284 = vpop.f32.mrb[0].mxu0
          %v1285 = vadd.f32 %v1201, %v1284
          %v1286 = vpop.f32.mrb[0].mxu0
          %v1287 = vadd.f32 %v1205, %v1286
          %1288 = vdwg.mxu0
          %1289 = vmatprep.subr.mxu0 %v1069
          %1290 = vmatpush1.msra.mxu0 %v1068
          %1291 = vmatprep.subr.mxu0 %v1073
          %1292 = vmatpush1.msra.mxu0 %v1072
          %1293 = vmatprep.subr.mxu0 %v1077
          %1294 = vmatpush1.msra.mxu0 %v1076
          %1295 = vmatprep.subr.mxu0 %v1081
          %1296 = vmatpush1.msra.mxu0 %v1080
          %1297 = vmatprep.subr.mxu0 %v1085
          %1298 = vmatpush1.msra.mxu0 %v1084
          %1299 = vmatprep.subr.mxu0 %v1089
          %1300 = vmatpush1.msra.mxu0 %v1088
          %1301 = vmatprep.subr.mxu0 %v1093
          %1302 = vmatpush1.msra.mxu0 %v1092
          %1303 = vmatprep.subr.mxu0 %v1097
          %1304 = vmatpush1.msra.mxu0 %v1096
          %1305 = vmatprep.subr.mxu0 %v1101
          %1306 = vmatpush1.msra.mxu0 %v1100
          %1307 = vmatprep.subr.mxu0 %v1105
          %1308 = vmatpush1.msra.mxu0 %v1104
          %1309 = vmatprep.subr.mxu0 %v1109
          %1310 = vmatpush1.msra.mxu0 %v1108
          %1311 = vmatprep.subr.mxu0 %v1113
          %1312 = vmatpush1.msra.mxu0 %v1112
          %1313 = vmatprep.subr.mxu0 %v1117
          %1314 = vmatpush1.msra.mxu0 %v1116
          %1315 = vmatprep.subr.mxu0 %v1121
          %1316 = vmatpush1.msra.mxu0 %v1120
          %1317 = vmatprep.subr.mxu0 %v1125
          %1318 = vmatpush1.msra.mxu0 %v1124
          %1319 = vmatprep.subr.mxu0 %v1129
          %1320 = vmatpush1.msra.mxu0 %v1128
          %1321 = vmatprep.subr.mxu0 %v1133
          %1322 = vmatpush1.msra.mxu0 %v1132
          %1323 = vmatprep.subr.mxu0 %v1137
          %1324 = vmatpush1.msra.mxu0 %v1136
          %1325 = vmatprep.subr.mxu0 %v1141
          %1326 = vmatpush1.msra.mxu0 %v1140
          %1327 = vmatprep.subr.mxu0 %v1145
          %1328 = vmatpush1.msra.mxu0 %v1144
          %1329 = vmatprep.subr.mxu0 %v1149
          %1330 = vmatpush1.msra.mxu0 %v1148
          %1331 = vmatprep.subr.mxu0 %v1153
          %1332 = vmatpush1.msra.mxu0 %v1152
          %1333 = vmatprep.subr.mxu0 %v1157
          %1334 = vmatpush1.msra.mxu0 %v1156
          %1335 = vmatprep.subr.mxu0 %v1161
          %1336 = vmatpush1.msra.mxu0 %v1160
          %1337 = vmatprep.subr.mxu0 %v1165
          %1338 = vmatpush1.msra.mxu0 %v1164
          %1339 = vmatprep.subr.mxu0 %v1169
          %1340 = vmatpush1.msra.mxu0 %v1168
          %1341 = vmatprep.subr.mxu0 %v1173
          %1342 = vmatpush1.msra.mxu0 %v1172
          %1343 = vmatprep.subr.mxu0 %v1177
          %1344 = vmatpush1.msra.mxu0 %v1176
          %1345 = vmatprep.subr.mxu0 %v1181
          %1346 = vmatpush1.msra.mxu0 %v1180
          %1347 = vmatprep.subr.mxu0 %v1185
          %1348 = vmatpush1.msra.mxu0 %v1184
          %1349 = vmatprep.subr.mxu0 %v1189
          %1350 = vmatpush1.msra.mxu0 %v1188
          %1351 = vmatprep.subr.mxu0 %v1193
          %1352 = vmatpush1.msra.mxu0 %v1192
          %1353 = vmatprep.mubr.f32.mxu0 %v587
          %1354 = vmatmul.mubr.f32.gmra.mrb[0].mxu0 %v928
          %v1355 = vpop.f32.mrb[0].mxu0
          %v1356 = vadd.f32 %v1285, %v1355
          %v1357 = vpop.f32.mrb[0].mxu0
          %v1358 = vadd.f32 %v1287, %v1357
          %1359 = vdwg.mxu0
          %1360 = vmatprep.subr.mxu0 %v943
          %1361 = vmatpush1.msra.mxu0 %v942
          %1362 = vmatprep.subr.mxu0 %v947
          %1363 = vmatpush1.msra.mxu0 %v946
          %1364 = vmatprep.subr.mxu0 %v951
          %1365 = vmatpush1.msra.mxu0 %v950
          %1366 = vmatprep.subr.mxu0 %v955
          %1367 = vmatpush1.msra.mxu0 %v954
          %1368 = vmatprep.subr.mxu0 %v959
          %1369 = vmatpush1.msra.mxu0 %v958
          %1370 = vmatprep.subr.mxu0 %v963
          %1371 = vmatpush1.msra.mxu0 %v962
          %1372 = vmatprep.subr.mxu0 %v967
          %1373 = vmatpush1.msra.mxu0 %v966
          %1374 = vmatprep.subr.mxu0 %v971
          %1375 = vmatpush1.msra.mxu0 %v970
          %1376 = vmatprep.subr.mxu0 %v975
          %1377 = vmatpush1.msra.mxu0 %v974
          %1378 = vmatprep.subr.mxu0 %v979
          %1379 = vmatpush1.msra.mxu0 %v978
          %1380 = vmatprep.subr.mxu0 %v983
          %1381 = vmatpush1.msra.mxu0 %v982
          %1382 = vmatprep.subr.mxu0 %v987
          %1383 = vmatpush1.msra.mxu0 %v986
          %1384 = vmatprep.subr.mxu0 %v991
          %1385 = vmatpush1.msra.mxu0 %v990
          %1386 = vmatprep.subr.mxu0 %v995
          %1387 = vmatpush1.msra.mxu0 %v994
          %1388 = vmatprep.subr.mxu0 %v999
          %1389 = vmatpush1.msra.mxu0 %v998
          %1390 = vmatprep.subr.mxu0 %v1003
          %1391 = vmatpush1.msra.mxu0 %v1002
          %1392 = vmatprep.subr.mxu0 %v1007
          %1393 = vmatpush1.msra.mxu0 %v1006
          %1394 = vmatprep.subr.mxu0 %v1011
          %1395 = vmatpush1.msra.mxu0 %v1010
          %1396 = vmatprep.subr.mxu0 %v1015
          %1397 = vmatpush1.msra.mxu0 %v1014
          %1398 = vmatprep.subr.mxu0 %v1019
          %1399 = vmatpush1.msra.mxu0 %v1018
          %1400 = vmatprep.subr.mxu0 %v1023
          %1401 = vmatpush1.msra.mxu0 %v1022
          %1402 = vmatprep.subr.mxu0 %v1027
          %1403 = vmatpush1.msra.mxu0 %v1026
          %1404 = vmatprep.subr.mxu0 %v1031
          %1405 = vmatpush1.msra.mxu0 %v1030
          %1406 = vmatprep.subr.mxu0 %v1035
          %1407 = vmatpush1.msra.mxu0 %v1034
          %1408 = vmatprep.subr.mxu0 %v1039
          %1409 = vmatpush1.msra.mxu0 %v1038
          %1410 = vmatprep.subr.mxu0 %v1043
          %1411 = vmatpush1.msra.mxu0 %v1042
          %1412 = vmatprep.subr.mxu0 %v1047
          %1413 = vmatpush1.msra.mxu0 %v1046
          %1414 = vmatprep.subr.mxu0 %v1051
          %1415 = vmatpush1.msra.mxu0 %v1050
          %1416 = vmatprep.subr.mxu0 %v1055
          %1417 = vmatpush1.msra.mxu0 %v1054
          %1418 = vmatprep.subr.mxu0 %v1059
          %1419 = vmatpush1.msra.mxu0 %v1058
          %1420 = vmatprep.subr.mxu0 %v1063
          %1421 = vmatpush1.msra.mxu0 %v1062
          %1422 = vmatprep.subr.mxu0 %v1067
          %1423 = vmatpush1.msra.mxu0 %v1066
          %1424 = vmatprep.mubr.f32.mxu0 %v937
          %1425 = vmatmul.mubr.f32.gmra.mrb[0].mxu0 %v936
          %v1426 = vpop.f32.mrb[0].mxu0
          %v1427 = vadd.f32 %v1209, %v1426
          %v1428 = vpop.f32.mrb[0].mxu0
          %v1429 = vadd.f32 %v1213, %v1428
          %1430 = vdwg.mxu0
          %1431 = vmatprep.subr.mxu0 %v1071
          %1432 = vmatpush1.msra.mxu0 %v1070
          %1433 = vmatprep.subr.mxu0 %v1075
          %1434 = vmatpush1.msra.mxu0 %v1074
          %1435 = vmatprep.subr.mxu0 %v1079
          %1436 = vmatpush1.msra.mxu0 %v1078
          %1437 = vmatprep.subr.mxu0 %v1083
          %1438 = vmatpush1.msra.mxu0 %v1082
          %1439 = vmatprep.subr.mxu0 %v1087
          %1440 = vmatpush1.msra.mxu0 %v1086
          %1441 = vmatprep.subr.mxu0 %v1091
          %1442 = vmatpush1.msra.mxu0 %v1090
          %1443 = vmatprep.subr.mxu0 %v1095
          %1444 = vmatpush1.msra.mxu0 %v1094
          %1445 = vmatprep.subr.mxu0 %v1099
          %1446 = vmatpush1.msra.mxu0 %v1098
          %1447 = vmatprep.subr.mxu0 %v1103
          %1448 = vmatpush1.msra.mxu0 %v1102
          %1449 = vmatprep.subr.mxu0 %v1107
          %1450 = vmatpush1.msra.mxu0 %v1106
          %1451 = vmatprep.subr.mxu0 %v1111
          %1452 = vmatpush1.msra.mxu0 %v1110
          %1453 = vmatprep.subr.mxu0 %v1115
          %1454 = vmatpush1.msra.mxu0 %v1114
          %1455 = vmatprep.subr.mxu0 %v1119
          %1456 = vmatpush1.msra.mxu0 %v1118
          %1457 = vmatprep.subr.mxu0 %v1123
          %1458 = vmatpush1.msra.mxu0 %v1122
          %1459 = vmatprep.subr.mxu0 %v1127
          %1460 = vmatpush1.msra.mxu0 %v1126
          %1461 = vmatprep.subr.mxu0 %v1131
          %1462 = vmatpush1.msra.mxu0 %v1130
          %1463 = vmatprep.subr.mxu0 %v1135
          %1464 = vmatpush1.msra.mxu0 %v1134
          %1465 = vmatprep.subr.mxu0 %v1139
          %1466 = vmatpush1.msra.mxu0 %v1138
          %1467 = vmatprep.subr.mxu0 %v1143
          %1468 = vmatpush1.msra.mxu0 %v1142
          %1469 = vmatprep.subr.mxu0 %v1147
          %1470 = vmatpush1.msra.mxu0 %v1146
          %1471 = vmatprep.subr.mxu0 %v1151
          %1472 = vmatpush1.msra.mxu0 %v1150
          %1473 = vmatprep.subr.mxu0 %v1155
          %1474 = vmatpush1.msra.mxu0 %v1154
          %1475 = vmatprep.subr.mxu0 %v1159
          %1476 = vmatpush1.msra.mxu0 %v1158
          %1477 = vmatprep.subr.mxu0 %v1163
          %1478 = vmatpush1.msra.mxu0 %v1162
          %1479 = vmatprep.subr.mxu0 %v1167
          %1480 = vmatpush1.msra.mxu0 %v1166
          %1481 = vmatprep.subr.mxu0 %v1171
          %1482 = vmatpush1.msra.mxu0 %v1170
          %1483 = vmatprep.subr.mxu0 %v1175
          %1484 = vmatpush1.msra.mxu0 %v1174
          %1485 = vmatprep.subr.mxu0 %v1179
          %1486 = vmatpush1.msra.mxu0 %v1178
          %1487 = vmatprep.subr.mxu0 %v1183
          %1488 = vmatpush1.msra.mxu0 %v1182
          %1489 = vmatprep.subr.mxu0 %v1187
          %1490 = vmatpush1.msra.mxu0 %v1186
          %1491 = vmatprep.subr.mxu0 %v1191
          %1492 = vmatpush1.msra.mxu0 %v1190
          %1493 = vmatprep.subr.mxu0 %v1195
          %1494 = vmatpush1.msra.mxu0 %v1194
          %1495 = vmatprep.mubr.f32.mxu0 %v587
          %1496 = vmatmul.mubr.f32.gmra.mrb[0].mxu0 %v928
          %v1497 = vpop.f32.mrb[0].mxu0
          %v1498 = vadd.f32 %v1427, %v1497
          %v1499 = vpop.f32.mrb[0].mxu0
          %v1500 = vadd.f32 %v1429, %v1499
          %1501 = vdwg.mxu0
          %v1502 = vxor.u32 %v1356, 2147483648
          %v1503 = vmul.f32 %v1502, 1.442695
          %v1504 = vpow.pop %v1503
          %v1505 = vadd.f32 %v1504, 1.0
          %v1506 = vrcp.pop %v1505
          %v1507 = vmul.f32 1.0, %v1506
          %v1508 = vxor.u32 %v1358, 2147483648
          %v1509 = vmul.f32 %v1508, 1.442695
          %v1510 = vpow.pop %v1509
          %v1511 = vadd.f32 %v1510, 1.0
          %v1512 = vrcp.pop %v1511
          %v1513 = vmul.f32 1.0, %v1512
          %v1514 = vtanh.pop %v1498
          %v1515 = vxor.u32 %v1500, 2147483648
          %v1516 = vmul.f32 %v1515, 1.442695
          %v1517 = vpow.pop %v1516
          %v1518 = vadd.f32 %v1517, 1.0
          %v1519 = vrcp.pop %v1518
          %v1520 = vmul.f32 1.0, %v1519
          %v1521 = vld [vmem:[#allocation11] sm:$0x3]
          %v1522 = vmul.f32 %v1513, %v1521
          %v1523 = vmul.f32 %v1507, %v1514
          %v1524 = vadd.f32 %v1522, %v1523
          %v1525 = vtanh.pop %v1524
          %v1526 = vmul.f32 %v1520, %v1525
          %1527 = vst [vmem:[#allocation20] sm:$0x3] %v1524
          %1528 = vst [vmem:[#allocation18] sm:$0x3] %v1526
          %v1529 = vld [vmem:[#allocation14] sm:$0xff]
          %v1530 = vld [vmem:[#allocation14 + $0x8] sm:$0xff]
          %v1531 = vld [vmem:[#allocation14 + $0x10] sm:$0xff]
          %v1532 = vld [vmem:[#allocation14 + $0x18] sm:$0xff]
          %v1533 = vld [vmem:[#allocation14 + $0x20] sm:$0xff]
          %v1534 = vld [vmem:[#allocation14 + $0x28] sm:$0xff]
          %v1535 = vld [vmem:[#allocation14 + $0x30] sm:$0xff]
          %v1536 = vld [vmem:[#allocation14 + $0x38] sm:$0xff]
          %v1537 = vld [vmem:[#allocation14 + $0x40] sm:$0xff]
          %v1538 = vld [vmem:[#allocation14 + $0x48] sm:$0xff]
          %v1539 = vld [vmem:[#allocation14 + $0x50] sm:$0xff]
          %v1540 = vld [vmem:[#allocation14 + $0x58] sm:$0xff]
          %v1541 = vld [vmem:[#allocation14 + $0x60] sm:$0xff]
          %v1542 = vld [vmem:[#allocation14 + $0x68] sm:$0xff]
          %v1543 = vld [vmem:[#allocation14 + $0x70] sm:$0xff]
          %v1544 = vld [vmem:[#allocation14 + $0x78] sm:$0xff]
          %v1545 = vld [vmem:[#allocation15] sm:$0x1]
          %v1547 = vlaneseq
          %v1548 = vshrl.u32 %v1547, 7
          %v1549 = vsub.s32 0, %v1548
          %v1550 = vrot.slane %v1545, %v1549
          %1552 = vmatprep.subr.mxu0 0.0
          %1553 = vmatpush1.msra.mxu0 %v1529
          %1554 = vmatprep.subr.mxu0 0.0
          %1555 = vmatpush1.msra.mxu0 %v1530
          %1556 = vmatprep.subr.mxu0 0.0
          %1557 = vmatpush1.msra.mxu0 %v1531
          %1558 = vmatprep.subr.mxu0 0.0
          %1559 = vmatpush1.msra.mxu0 %v1532
          %1560 = vmatprep.subr.mxu0 0.0
          %1561 = vmatpush1.msra.mxu0 %v1533
          %1562 = vmatprep.subr.mxu0 0.0
          %1563 = vmatpush1.msra.mxu0 %v1534
          %1564 = vmatprep.subr.mxu0 0.0
          %1565 = vmatpush1.msra.mxu0 %v1535
          %1566 = vmatprep.subr.mxu0 0.0
          %1567 = vmatpush1.msra.mxu0 %v1536
          %1568 = vmatprep.subr.mxu0 0.0
          %1569 = vmatpush1.msra.mxu0 %v1537
          %1570 = vmatprep.subr.mxu0 0.0
          %1571 = vmatpush1.msra.mxu0 %v1538
          %1572 = vmatprep.subr.mxu0 0.0
          %1573 = vmatpush1.msra.mxu0 %v1539
          %1574 = vmatprep.subr.mxu0 0.0
          %1575 = vmatpush1.msra.mxu0 %v1540
          %1576 = vmatprep.subr.mxu0 0.0
          %1577 = vmatpush1.msra.mxu0 %v1541
          %1578 = vmatprep.subr.mxu0 0.0
          %1579 = vmatpush1.msra.mxu0 %v1542
          %1580 = vmatprep.subr.mxu0 0.0
          %1581 = vmatpush1.msra.mxu0 %v1543
          %1582 = vmatprep.subr.mxu0 0.0
          %1583 = vmatpush1.msra.mxu0 %v1544
          %1584 = vmatprep.subr.mxu0 0.0
          %1585 = vmatpush1.msra.mxu0 0.0
          %1586 = vmatprep.subr.mxu0 0.0
          %1587 = vmatpush1.msra.mxu0 0.0
          %1588 = vmatprep.subr.mxu0 0.0
          %1589 = vmatpush1.msra.mxu0 0.0
          %1590 = vmatprep.subr.mxu0 0.0
          %1591 = vmatpush1.msra.mxu0 0.0
          %1592 = vmatprep.subr.mxu0 0.0
          %1593 = vmatpush1.msra.mxu0 0.0
          %1594 = vmatprep.subr.mxu0 0.0
          %1595 = vmatpush1.msra.mxu0 0.0
          %1596 = vmatprep.subr.mxu0 0.0
          %1597 = vmatpush1.msra.mxu0 0.0
          %1598 = vmatprep.subr.mxu0 0.0
          %1599 = vmatpush1.msra.mxu0 0.0
          %1600 = vmatprep.subr.mxu0 0.0
          %1601 = vmatpush1.msra.mxu0 0.0
          %1602 = vmatprep.subr.mxu0 0.0
          %1603 = vmatpush1.msra.mxu0 0.0
          %1604 = vmatprep.subr.mxu0 0.0
          %1605 = vmatpush1.msra.mxu0 0.0
          %1606 = vmatprep.subr.mxu0 0.0
          %1607 = vmatpush1.msra.mxu0 0.0
          %1608 = vmatprep.subr.mxu0 0.0
          %1609 = vmatpush1.msra.mxu0 0.0
          %1610 = vmatprep.subr.mxu0 0.0
          %1611 = vmatpush1.msra.mxu0 0.0
          %1612 = vmatprep.subr.mxu0 0.0
          %1613 = vmatpush1.msra.mxu0 0.0
          %1614 = vmatprep.subr.mxu0 0.0
          %1615 = vmatpush1.msra.mxu0 0.0
          %1616 = vmatprep.mubr.f32.mxu0 0.0
          %1617 = vmatmul.mubr.f32.gmra.mrb[0].mxu0 %v1526
          %v1618 = vpop.f32.mrb[0].mxu0
          %v1619 = vadd.f32 %v1550, %v1618
          %v1620 = vpop.f32.mrb[0].mxu0
          %1621 = vdwg.mxu0
          %1622 = vst [vmem:[#allocation17] sm:$0x3] %v1619
        $region96: #{tpu_custom_call.1} parent=63 // pred_fallthru
          _
        // Predicated region
        $region97: #{tpu_custom_call.1} parent=63 // pred_check
          %p1623 = pneg %p317
        $region98: #{tpu_custom_call.1} parent=63 // pred_check_branch
          %1625 = sbr.rel (%p1623) target = $region100
        $region99: #{tpu_custom_call.1} parent=63 // pred_region
          %s1627 = ssub.s32 32, 32
          %1628 = vsyncadd [#allocation8], %s1627
          %s1629 = smul.addr %s38, 32
          %s1630 = scalar_lea.hbm %s11, %s1629
          %s1632 = sshll.u32 [#allocation17], 4
          %s1633 = int_to_ptr.vmem [resolvable:$true] %s1632
          %1635 = dma.vmem_to_hbm [thread:$0]  %s1633, 32, %s1630, [#allocation8]
        $region100: #{tpu_custom_call.1} parent=63 // pred_fallthru
          _
        // Predicated region
        $region101: #{tpu_custom_call.1} parent=63 // pred_check
          %p1636 = pneg %p343
        $region102: #{tpu_custom_call.1} parent=63 // pred_check_branch
          %1638 = sbr.rel (%p1636) target = $region104
        $region103: #{tpu_custom_call.1} parent=63 // pred_region
          %s1640 = ssub.s32 32, 32
          %1641 = vsyncadd [#allocation19], %s1640
          %s1642 = smul.addr %s38, 32
          %s1643 = scalar_lea.hbm %s12, %s1642
          %s1645 = sshll.u32 [#allocation18], 4
          %s1646 = int_to_ptr.vmem [resolvable:$true] %s1645
          %1648 = dma.vmem_to_hbm [thread:$0]  %s1646, 32, %s1643, [#allocation19]
        $region104: #{tpu_custom_call.1} parent=63 // pred_fallthru
          _
        // Predicated region
        $region105: #{tpu_custom_call.1} parent=63 // pred_check
          %p1649 = pneg %p369
        $region106: #{tpu_custom_call.1} parent=63 // pred_check_branch
          %1651 = sbr.rel (%p1649) target = $region108
        $region107: #{tpu_custom_call.1} parent=63 // pred_region
          %s1653 = ssub.s32 32, 32
          %1654 = vsyncadd [#allocation19], %s1653
          %s1655 = smul.addr %s38, 32
          %s1656 = scalar_lea.hbm %s13, %s1655
          %s1658 = sshll.u32 [#allocation20], 4
          %s1659 = int_to_ptr.vmem [resolvable:$true] %s1658
          %1661 = dma.vmem_to_hbm [thread:$0]  %s1659, 32, %s1656, [#allocation19]
        $region108: #{tpu_custom_call.1} parent=63 // pred_fallthru
          _
        // Predicated region
        $region109: #{tpu_custom_call.1} parent=63 // pred_check
          %p1662 = pneg %p317
        $region110: #{tpu_custom_call.1} parent=63 // pred_check_branch
          %1664 = sbr.rel (%p1662) target = $region112
        $region111: #{tpu_custom_call.1} parent=63 // pred_region
          %1665 = dma.done [#allocation8], 32
        $region112: #{tpu_custom_call.1} parent=63 // pred_fallthru
          _
        // Predicated region
        $region113: #{tpu_custom_call.1} parent=63 // pred_check
          %p1666 = pneg %p343
        $region114: #{tpu_custom_call.1} parent=63 // pred_check_branch
          %1668 = sbr.rel (%p1666) target = $region116
        $region115: #{tpu_custom_call.1} parent=63 // pred_region
          %1669 = dma.done [#allocation19], 32
        $region116: #{tpu_custom_call.1} parent=63 // pred_fallthru
          _
        // Predicated region
        $region117: #{tpu_custom_call.1} parent=63 // pred_check
          %p1670 = pneg %p369
        $region118: #{tpu_custom_call.1} parent=63 // pred_check_branch
          %1672 = sbr.rel (%p1670) target = $region120
        $region119: #{tpu_custom_call.1} parent=63 // pred_region
          %1673 = dma.done [#allocation19], 32
        $region120: #{tpu_custom_call.1} parent=63 // pred_fallthru
          _
      $region64: #{tpu_custom_call.1} parent=5 // pred_fallthru
        _
      %p1674 = scmp.le.s32.totalorder 2, %s29
      // Predicated region
      $region121: #{tpu_custom_call.1} parent=5 // pred_check
        %p1675 = pneg %p1674
      $region122: #{tpu_custom_call.1} parent=5 // pred_check_branch
        %1677 = sbr.rel (%p1675) target = $region124
      $region123: #{tpu_custom_call.1} parent=5 // pred_region
        %s1678 = ssub.s32 %s29, 2
      $region124: #{tpu_custom_call.1} parent=5 // pred_fallthru
        _
    $region6: #{tpu_custom_call.1} parent=1 // loop_footer
      %s33 = sadd.s32 1, %s29
    $region7: #{tpu_custom_call.1} parent=1 // loop_footer_branch
      %28 = sbr.rel target = $region3
    $region8: #{tpu_custom_call.1} parent=1 // loop_exit
      _
    %1679 = vsyncpa [#allocation7], 1
    %s1680 = scalar_lea.sflag [#allocation7], 1
    %1681 = vsyncpa %s1680, 1
    %1682 = vsyncpa [#allocation10], 1
    %1683 = vsyncpa [#allocation13], 1
    %1684 = vsyncpa [#allocation16], 1
    %1685 = vsyncpa [#allocation8], 1
    %s1686 = scalar_lea.sflag [#allocation8], 1
    %1687 = vsyncpa %s1686, 1
    %1688 = vsyncpa [#allocation19], 1

</llo_original>
